<compile_context>
chip_gen: v7x
topology: tpu7x:2x2x1
jax: 0.10.0
libtpu: 0.0.40
codegen_flags: <defaults>
</compile_context>

<pallas_src>
import functools

import jax
import jax.numpy as jnp
import numpy as np
from jax import lax
from jax.experimental import pallas as pl
from jax.experimental.pallas import tpu as pltpu


def _round_up(v, m):
    return (v + m - 1) // m * m


def _inverted_residual_kernel(x_ref, xt_ref, xb_ref,
                              w1_ref, b1_ref, wdw_ref, b2_ref, w2_ref, b3_ref,
                              wres_ref, o_ref,
                              *, W, strip_out_rows, stride, use_res, dw_dtype):
    i = pl.program_id(1)                       # strip index
    n_strips = pl.num_programs(1)

    ch_p = w1_ref.shape[1]                     # padded hidden dim (x128)
    cout_p = w2_ref.shape[1]                   # padded output dim (x128)
    rows_in = strip_out_rows * stride          # input rows in the main block
    Wo = W // stride
    cdt = jnp.float32 if dw_dtype is None else dw_dtype

    def mm(a, w):                              # MXU matmul, f32 accumulation
        return jnp.dot(a.astype(w.dtype), w, preferred_element_type=jnp.float32)

    def expand(v):                             # 1x1 conv (BN folded) + ReLU6
        return jnp.clip(mm(v, w1_ref[...]) + b1_ref[...], 0.0, 6.0)

    # ---- 1x1 expand on the main strip and (recomputed) halo rows ----
    x_main = x_ref[0]                          # (rows_in*W, cin) unpadded lanes
    h_mid = expand(x_main)
    h_top = expand(xt_ref[0])
    h_top = h_top * (i > 0).astype(h_top.dtype)          # zero above image top
    if stride == 1:
        h_bot = expand(xb_ref[0])
        h_bot = h_bot * (i < n_strips - 1).astype(h_bot.dtype)  # zero below img
        h = jnp.concatenate([h_top, h_mid, h_bot], axis=0)
    else:
        # stride 2: the last needed row (2r+1) lies inside the main block.
        h = jnp.concatenate([h_top, h_mid], axis=0)
    h = h.astype(cdt)
    M_ext = h.shape[0]

    # ---- 3x3 depthwise conv (BN folded), zero padding handled by halos/masks
    wdw = wdw_ref[...].astype(cdt)             # (3, 3, ch_p)
    if (W & (W - 1)) == 0:                     # single iota; col = pos & (W-1)
        col = lax.broadcasted_iota(jnp.int32, (M_ext, ch_p), 0) & (W - 1)
    else:                                      # fallback: periodic column iota
        col = lax.broadcasted_iota(
            jnp.int32, (M_ext // W, W, ch_p), 1).reshape(M_ext, ch_p)
    not_first_col = col >= 1
    not_last_col = col < (W - 1)

    h_l = jnp.where(not_first_col, pltpu.roll(h, shift=1, axis=0), 0.0)
    h_r = jnp.where(not_last_col, pltpu.roll(h, shift=M_ext - 1, axis=0), 0.0)

    def row_taps(kh):                          # combine the three W taps
        return h_l * wdw[kh, 0] + h * wdw[kh, 1] + h_r * wdw[kh, 2]

    acc_ext = (row_taps(1)
               + pltpu.roll(row_taps(0), shift=W, axis=0)
               + pltpu.roll(row_taps(2), shift=M_ext - W, axis=0))
    # Extended row 0 (top halo) and the last extended row contain roll
    # wraparound garbage but are never part of the slice below.

    b2 = b2_ref[...].astype(cdt)
    if stride == 1:
        acc = acc_ext[W:(rows_in + 1) * W, :]
    else:
        acc = acc_ext[W:, :]
        acc = acc.reshape(strip_out_rows, 2, Wo, 2, ch_p)[:, 0, :, 0, :]
        acc = acc.reshape(strip_out_rows * Wo, ch_p)
    acc = jnp.clip(acc + b2, 0.0, 6.0)

    # ---- 1x1 project conv (BN folded) + bias (+ residual) ----
    y = mm(acc, w2_ref[...]) + b3_ref[...]     # (strip_out_rows*Wo, cout_p) f32
    if use_res:
        # Residual through a tiny (cin x cout_p) identity matmul -> no lane pad.
        y = y + mm(x_main, wres_ref[...])
    o_ref[0] = y.astype(o_ref.dtype)


def fold_and_pad_params(params, *, inp, oup, lane=128, mxu_dtype=jnp.bfloat16):
    """One-time BN-scale folding + lane padding of hidden/output dims only.

    The input (K) dim of w1 stays unpadded so the activation DMA carries no
    padding.  MXU operands default to bf16 (f32 accumulation in-kernel)."""
    hidden = params["w1"].shape[1]
    ch_p = _round_up(hidden, lane)
    cout_p = _round_up(oup, lane)

    w1 = params["w1"] * params["s1"]           # per-output-column scale
    wdw = params["wdw"] * params["s2"][0]      # per-channel scale
    w2 = params["w2"] * params["s3"]           # per-output-column scale

    return dict(
        w1=jnp.pad(w1, ((0, 0), (0, ch_p - hidden))).astype(mxu_dtype),
        b1=jnp.pad(params["b1"], ((0, 0), (0, ch_p - hidden))),
        wdw=jnp.pad(wdw, ((0, 0), (0, 0), (0, ch_p - hidden))),
        b2=jnp.pad(params["b2"], ((0, 0), (0, ch_p - hidden))),
        w2=jnp.pad(w2, ((0, ch_p - hidden), (0, cout_p - oup))).astype(mxu_dtype),
        b3=jnp.pad(params["b3"], ((0, 0), (0, cout_p - oup))),
        wres=jnp.eye(inp, cout_p, dtype=jnp.float32),   # residual pad-identity
        ch_p=ch_p, cout_p=cout_p)


def _pick_strip_rows(Ho, W, Wo, ch_p, stride, budget_bytes=6 << 20):
    """Largest strip (output rows) keeping ~8 live f32 temporaries <= budget.

    The 6 MiB default leaves headroom under v5e's 16 MiB scoped-VMEM default
    and well under v7x's 64 MiB physical VMEM incl. double-buffered blocks."""
    per_out_row = stride * W * ch_p * 4 * 8
    target = max(1, budget_bytes // per_out_row)
    if target >= Ho:
        return Ho
    for d in range(min(target, Ho), 0, -1):
        if Ho % d == 0 and (d * stride * W) % 8 == 0 and (d * Wo) % 8 == 0:
            return d
    return Ho


def inverted_residual(x_nchw, prepared, *, stride, inp, oup,
                      dw_dtype=None, strip_rows=None):
    """NCHW in, NCHW out (PyTorch parity).  `prepared` from fold_and_pad_params."""
    use_res = (stride == 1) and (inp == oup)
    N, C, H, W = x_nchw.shape
    assert C == inp and stride in (1, 2)
    if stride == 2:
        assert H % 2 == 0 and W % 2 == 0   # TODO(synk): odd extents unsupported
    assert W % 8 == 0                      # halo row blocks are (1, W, cin)
    ch_p, cout_p = prepared["ch_p"], prepared["cout_p"]
    Ho, Wo = H // stride, W // stride

    if strip_rows is None:
        strip_rows = _pick_strip_rows(Ho, W, Wo, ch_p, stride)
    assert Ho % strip_rows == 0
    n_strips = Ho // strip_rows
    rows_in = strip_rows * stride
    assert n_strips == 1 or ((rows_in * W) % 8 == 0 and (strip_rows * Wo) % 8 == 0)

    # NCHW -> NHWC (lane-dense channels-last), flatten spatial; channels are
    # NOT padded in HBM -- only weights carry the 128-lane padding.
    # TODO(synk): keep the surrounding model NHWC so this transpose (and the
    # output slice/transpose below) disappears entirely.
    x = jnp.transpose(x_nchw, (0, 2, 3, 1)).reshape(N, H * W, C)

    kernel = functools.partial(
        _inverted_residual_kernel, W=W, strip_out_rows=strip_rows,
        stride=stride, use_res=use_res, dw_dtype=dw_dtype)

    def resident(arr):   # full array, constant block index -> stays in VMEM
        if arr.ndim == 2:
            return pl.BlockSpec(arr.shape, lambda n, i: (0, 0))
        return pl.BlockSpec(arr.shape, lambda n, i: (0, 0, 0))

    last_row = H - 1
    out = pl.pallas_call(
        kernel,
        out_shape=jax.ShapeDtypeStruct((N, Ho * Wo, cout_p), x_nchw.dtype),
        grid=(N, n_strips),
        in_specs=[
            # main strip: rows_in image rows
            pl.BlockSpec((1, rows_in * W, C), lambda n, i: (n, i, 0)),
            # 1-row halo above (clamped; zeroed in-kernel at the image border)
            pl.BlockSpec((1, W, C),
                         lambda n, i: (n, jnp.maximum(i * rows_in - 1, 0), 0)),
            # 1-row halo below (clamped; unused for stride 2)
            pl.BlockSpec((1, W, C),
                         lambda n, i: (n, jnp.minimum((i + 1) * rows_in,
                                                      last_row), 0)),
            resident(prepared["w1"]), resident(prepared["b1"]),
            resident(prepared["wdw"]), resident(prepared["b2"]),
            resident(prepared["w2"]), resident(prepared["b3"]),
            resident(prepared["wres"]),
        ],
        out_specs=pl.BlockSpec((1, strip_rows * Wo, cout_p),
                               lambda n, i: (n, i, 0)),
        compiler_params=pltpu.CompilerParams(
            dimension_semantics=("parallel", "parallel"),
            vmem_limit_bytes=32 * 1024 * 1024),
    )(x, x, x, prepared["w1"], prepared["b1"], prepared["wdw"],
      prepared["b2"], prepared["w2"], prepared["b3"], prepared["wres"])

    # TODO(synk): in a full NHWC model, keep the lane-padded layout between
    # consecutive blocks instead of slicing / transposing back to NCHW here.
    out = out.reshape(N, Ho, Wo, cout_p)[..., :oup]
    return jnp.transpose(out, (0, 3, 1, 2))                 # back to NCHW


def make_params(key, inp, oup, expand_ratio, eps=1e-5):
    """Deterministic parameters matching the PyTorch module's shapes, with
    BatchNorm running stats expressed as per-channel scale/bias."""
    hidden = int(round(inp * expand_ratio))
    ks = jax.random.split(key, 12)

    def bn_fold(kg, kb, km, kv, c):
        gamma = 1.0 + 0.1 * jax.random.normal(kg, (c,), jnp.float32)
        beta = 0.1 * jax.random.normal(kb, (c,), jnp.float32)
        mean = 0.1 * jax.random.normal(km, (c,), jnp.float32)
        var = 0.5 + jnp.abs(jax.random.normal(kv, (c,), jnp.float32))
        scale = gamma / jnp.sqrt(var + eps)
        bias = beta - mean * scale
        return scale.reshape(1, c), bias.reshape(1, c)

    # conv1: PyTorch weight (hidden, inp, 1, 1) -> (inp, hidden)
    w1 = 0.2 * jax.random.normal(ks[0], (inp, hidden), jnp.float32)
    s1, b1 = bn_fold(ks[1], ks[2], ks[3], ks[4], hidden)
    # depthwise: PyTorch weight (hidden, 1, 3, 3) -> (3, 3, hidden)
    wdw = 0.2 * jax.random.normal(ks[5], (3, 3, hidden), jnp.float32)
    s2, b2 = bn_fold(ks[6], ks[7], ks[8], ks[9], hidden)
    # conv2: PyTorch weight (oup, hidden, 1, 1) -> (hidden, oup)
    w2 = 0.2 * jax.random.normal(ks[10], (hidden, oup), jnp.float32)
    s3, b3 = bn_fold(*jax.random.split(ks[11], 4), oup)

    return dict(w1=w1, s1=s1, b1=b1, wdw=wdw, s2=s2, b2=b2,
                w2=w2, s3=s3, b3=b3)


def ref_forward(x_nchw, p, *, stride, inp, oup):
    """Plain-JAX reference (correctness check only; unfolded params)."""
    use_res = (stride == 1) and (inp == oup)
    x = jnp.transpose(x_nchw, (0, 2, 3, 1)).astype(jnp.float32)
    h = jnp.einsum("nhwc,cd->nhwd", x, p["w1"])
    h = jnp.clip(h * p["s1"][0] + p["b1"][0], 0.0, 6.0)
    dw = p["wdw"][:, :, None, :]                            # HWIO, I=1
    h = lax.conv_general_dilated(
        h, dw, (stride, stride), ((1, 1), (1, 1)),
        dimension_numbers=("NHWC", "HWIO", "NHWC"),
        feature_group_count=h.shape[-1])
    h = jnp.clip(h * p["s2"][0] + p["b2"][0], 0.0, 6.0)
    y = jnp.einsum("nhwc,cd->nhwd", h, p["w2"])
    y = y * p["s3"][0] + p["b3"][0]
    if use_res:
        y = y + x
    return jnp.transpose(y, (0, 3, 1, 2))


if __name__ == "__main__":
    key = jax.random.PRNGKey(0)
    N, H, W = 2, 16, 16

    # ---- Case 1: stride 1, inp == oup -> residual path exercised ----------
    inp, oup, stride, expand_ratio = 4, 4, 1, 6
    kx, kp, kx2, kp2 = jax.random.split(key, 4)
    x = jax.random.normal(kx, (N, inp, H, W), jnp.float32)   # NCHW like PyTorch
    params = make_params(kp, inp, oup, expand_ratio)
    ref = jax.block_until_ready(
        ref_forward(x, params, stride=stride, inp=inp, oup=oup))

    # Default fast path: bf16 MXU operands (f32 accumulation); strip_rows=4
    # forces 4 spatial strips so the halo/recompute logic is exercised.
    prep_bf16 = fold_and_pad_params(params, inp=inp, oup=oup,
                                    mxu_dtype=jnp.bfloat16)
    out = inverted_residual(x, prep_bf16, stride=stride, inp=inp, oup=oup,
                            strip_rows=4)
    out = jax.block_until_ready(out)
    np.testing.assert_allclose(np.asarray(out), np.asarray(ref),
                               rtol=5e-2, atol=1e-1)

    # f32 everywhere: tight check of the exact forward semantics.
    prep_f32 = fold_and_pad_params(params, inp=inp, oup=oup,
                                   mxu_dtype=jnp.float32)
    out32 = inverted_residual(x, prep_f32, stride=stride, inp=inp, oup=oup,
                              strip_rows=4)
    out32 = jax.block_until_ready(out32)
    np.testing.assert_allclose(np.asarray(out32), np.asarray(ref),
                               rtol=1e-4, atol=1e-4)

    # ---- Case 2: stride 2, no residual (inp != oup), strip-tiled, f32 -----
    inp2, oup2, stride2, er2 = 4, 8, 2, 6
    x2 = jax.random.normal(kx2, (N, inp2, H, W), jnp.float32)
    params2 = make_params(kp2, inp2, oup2, er2)
    ref2 = jax.block_until_ready(
        ref_forward(x2, params2, stride=stride2, inp=inp2, oup=oup2))
    prep2 = fold_and_pad_params(params2, inp=inp2, oup=oup2,
                                mxu_dtype=jnp.float32)
    out2 = inverted_residual(x2, prep2, stride=stride2, inp=inp2, oup=oup2,
                             strip_rows=4)
    out2 = jax.block_until_ready(out2)
    np.testing.assert_allclose(np.asarray(out2), np.asarray(ref2),
                               rtol=1e-4, atol=1e-4)

    print("KERNEL_OK")
</pallas_src>

<mosaic_0001>
module attributes {stable_mosaic.version = 11 : i64} {
  func.func @_inverted_residual_kernel(%arg0: i32, %arg1: i32, %arg2: memref<1x64x4xf32, #tpu.memory_space<vmem>>, %arg3: memref<1x16x4xf32, #tpu.memory_space<vmem>>, %arg4: memref<1x16x4xf32, #tpu.memory_space<vmem>>, %arg5: memref<4x128xbf16, #tpu.memory_space<vmem>>, %arg6: memref<1x128xf32, #tpu.memory_space<vmem>>, %arg7: memref<3x3x128xf32, #tpu.memory_space<vmem>>, %arg8: memref<1x128xf32, #tpu.memory_space<vmem>>, %arg9: memref<128x128xbf16, #tpu.memory_space<vmem>>, %arg10: memref<1x128xf32, #tpu.memory_space<vmem>>, %arg11: memref<4x128xf32, #tpu.memory_space<vmem>>, %arg12: memref<1x64x128xf32, #tpu.memory_space<vmem>>) attributes {dimension_semantics = [#tpu.dimension_semantics<parallel>, #tpu.dimension_semantics<parallel>], iteration_bounds = array<i64: 2, 4>, scalar_prefetch = 0 : i64, scratch_operands = 0 : i64, tpu.core_type = #tpu.core_type<tc>, window_params = [{transform_indices = @transform_0, window_bounds = array<i64: 1, 64, 4>}, {transform_indices = @transform_1, window_bounds = array<i64: 1, 16, 4>}, {transform_indices = @transform_2, window_bounds = array<i64: 1, 16, 4>}, {pipeline_mode = #tpu.pipeline_mode<synchronous>, transform_indices = @transform_3, window_bounds = array<i64: 4, 128>}, {pipeline_mode = #tpu.pipeline_mode<synchronous>, transform_indices = @transform_4, window_bounds = array<i64: 1, 128>}, {pipeline_mode = #tpu.pipeline_mode<synchronous>, transform_indices = @transform_5, window_bounds = array<i64: 3, 3, 128>}, {pipeline_mode = #tpu.pipeline_mode<synchronous>, transform_indices = @transform_6, window_bounds = array<i64: 1, 128>}, {pipeline_mode = #tpu.pipeline_mode<synchronous>, transform_indices = @transform_7, window_bounds = array<i64: 128, 128>}, {pipeline_mode = #tpu.pipeline_mode<synchronous>, transform_indices = @transform_8, window_bounds = array<i64: 1, 128>}, {pipeline_mode = #tpu.pipeline_mode<synchronous>, transform_indices = @transform_9, window_bounds = array<i64: 4, 128>}, {transform_indices = @transform_10, window_bounds = array<i64: 1, 64, 128>}]} {
    %c0 = arith.constant 0 : index
    %c0_0 = arith.constant 0 : index
    %c0_1 = arith.constant 0 : index
    %0 = vector.load %arg2[%c0, %c0_0, %c0_1] : memref<1x64x4xf32, #tpu.memory_space<vmem>>, vector<1x64x4xf32>
    %1 = vector.shape_cast %0 : vector<1x64x4xf32> to vector<64x4xf32>
    %c0_2 = arith.constant 0 : index
    %c0_3 = arith.constant 0 : index
    %2 = vector.load %arg5[%c0_2, %c0_3] : memref<4x128xbf16, #tpu.memory_space<vmem>>, vector<4x128xbf16>
    %3 = arith.truncf %1 : vector<64x4xf32> to vector<64x4xbf16>
    %cst = arith.constant dense<0.000000e+00> : vector<64x128xf32>
    %4 = tpu.matmul %3, %2, %cst {dimension_numbers = #tpu.dot_dimension_numbers<[1], [0], [0], [1], [0, 0, 1, 1], [], []>} : vector<64x4xbf16>, vector<4x128xbf16>, vector<64x128xf32> -> vector<64x128xf32>
    %c0_4 = arith.constant 0 : index
    %c0_5 = arith.constant 0 : index
    %5 = vector.load %arg6[%c0_4, %c0_5] : memref<1x128xf32, #tpu.memory_space<vmem>>, vector<1x128xf32>
    %6 = vector.broadcast %5 : vector<1x128xf32> to vector<64x128xf32>
    %7 = arith.addf %4, %6 : vector<64x128xf32>
    %cst_6 = arith.constant 0.000000e+00 : f32
    %cst_7 = arith.constant 6.000000e+00 : f32
    %8 = vector.broadcast %cst_6 : f32 to vector<64x128xf32>
    %9 = arith.maximumf %8, %7 : vector<64x128xf32>
    %10 = vector.broadcast %cst_7 : f32 to vector<64x128xf32>
    %11 = arith.minimumf %10, %9 : vector<64x128xf32>
    %c0_8 = arith.constant 0 : index
    %c0_9 = arith.constant 0 : index
    %c0_10 = arith.constant 0 : index
    %12 = vector.load %arg3[%c0_8, %c0_9, %c0_10] : memref<1x16x4xf32, #tpu.memory_space<vmem>>, vector<1x16x4xf32>
    %13 = vector.shape_cast %12 : vector<1x16x4xf32> to vector<16x4xf32>
    %c0_11 = arith.constant 0 : index
    %c0_12 = arith.constant 0 : index
    %14 = vector.load %arg5[%c0_11, %c0_12] : memref<4x128xbf16, #tpu.memory_space<vmem>>, vector<4x128xbf16>
    %15 = arith.truncf %13 : vector<16x4xf32> to vector<16x4xbf16>
    %cst_13 = arith.constant dense<0.000000e+00> : vector<16x128xf32>
    %16 = tpu.matmul %15, %14, %cst_13 {dimension_numbers = #tpu.dot_dimension_numbers<[1], [0], [0], [1], [0, 0, 1, 1], [], []>} : vector<16x4xbf16>, vector<4x128xbf16>, vector<16x128xf32> -> vector<16x128xf32>
    %c0_14 = arith.constant 0 : index
    %c0_15 = arith.constant 0 : index
    %17 = vector.load %arg6[%c0_14, %c0_15] : memref<1x128xf32, #tpu.memory_space<vmem>>, vector<1x128xf32>
    %18 = vector.broadcast %17 : vector<1x128xf32> to vector<16x128xf32>
    %19 = arith.addf %16, %18 : vector<16x128xf32>
    %cst_16 = arith.constant 0.000000e+00 : f32
    %cst_17 = arith.constant 6.000000e+00 : f32
    %20 = vector.broadcast %cst_16 : f32 to vector<16x128xf32>
    %21 = arith.maximumf %20, %19 : vector<16x128xf32>
    %22 = vector.broadcast %cst_17 : f32 to vector<16x128xf32>
    %23 = arith.minimumf %22, %21 : vector<16x128xf32>
    %c0_i32 = arith.constant 0 : i32
    %24 = arith.cmpi sgt, %arg1, %c0_i32 : i32
    %25 = arith.extui %24 : i1 to i32
    %26 = arith.sitofp %25 : i32 to f32
    %27 = vector.broadcast %26 : f32 to vector<16x128xf32>
    %28 = arith.mulf %23, %27 : vector<16x128xf32>
    %c0_18 = arith.constant 0 : index
    %c0_19 = arith.constant 0 : index
    %c0_20 = arith.constant 0 : index
    %29 = vector.load %arg4[%c0_18, %c0_19, %c0_20] : memref<1x16x4xf32, #tpu.memory_space<vmem>>, vector<1x16x4xf32>
    %30 = vector.shape_cast %29 : vector<1x16x4xf32> to vector<16x4xf32>
    %c0_21 = arith.constant 0 : index
    %c0_22 = arith.constant 0 : index
    %31 = vector.load %arg5[%c0_21, %c0_22] : memref<4x128xbf16, #tpu.memory_space<vmem>>, vector<4x128xbf16>
    %32 = arith.truncf %30 : vector<16x4xf32> to vector<16x4xbf16>
    %cst_23 = arith.constant dense<0.000000e+00> : vector<16x128xf32>
    %33 = tpu.matmul %32, %31, %cst_23 {dimension_numbers = #tpu.dot_dimension_numbers<[1], [0], [0], [1], [0, 0, 1, 1], [], []>} : vector<16x4xbf16>, vector<4x128xbf16>, vector<16x128xf32> -> vector<16x128xf32>
    %c0_24 = arith.constant 0 : index
    %c0_25 = arith.constant 0 : index
    %34 = vector.load %arg6[%c0_24, %c0_25] : memref<1x128xf32, #tpu.memory_space<vmem>>, vector<1x128xf32>
    %35 = vector.broadcast %34 : vector<1x128xf32> to vector<16x128xf32>
    %36 = arith.addf %33, %35 : vector<16x128xf32>
    %cst_26 = arith.constant 0.000000e+00 : f32
    %cst_27 = arith.constant 6.000000e+00 : f32
    %37 = vector.broadcast %cst_26 : f32 to vector<16x128xf32>
    %38 = arith.maximumf %37, %36 : vector<16x128xf32>
    %39 = vector.broadcast %cst_27 : f32 to vector<16x128xf32>
    %40 = arith.minimumf %39, %38 : vector<16x128xf32>
    %c3_i32 = arith.constant 3 : i32
    %41 = arith.cmpi slt, %arg1, %c3_i32 : i32
    %42 = arith.extui %41 : i1 to i32
    %43 = arith.sitofp %42 : i32 to f32
    %44 = vector.broadcast %43 : f32 to vector<16x128xf32>
    %45 = arith.mulf %40, %44 : vector<16x128xf32>
    %46 = tpu.concatenate %28, %11, %45 in 0 : vector<16x128xf32>, vector<64x128xf32>, vector<16x128xf32> -> vector<96x128xf32>
    %c0_28 = arith.constant 0 : index
    %c0_29 = arith.constant 0 : index
    %c0_30 = arith.constant 0 : index
    %47 = vector.load %arg7[%c0_28, %c0_29, %c0_30] : memref<3x3x128xf32, #tpu.memory_space<vmem>>, vector<3x3x128xf32>
    %48 = tpu.iota {dimensions = array<i32: 0>} : vector<96x128xi32>
    %c15_i32 = arith.constant 15 : i32
    %49 = vector.broadcast %c15_i32 : i32 to vector<96x128xi32>
    %50 = arith.andi %48, %49 : vector<96x128xi32>
    %c1_i32 = arith.constant 1 : i32
    %51 = vector.broadcast %c1_i32 : i32 to vector<96x128xi32>
    %52 = arith.cmpi sge, %50, %51 : vector<96x128xi32>
    %c15_i32_31 = arith.constant 15 : i32
    %53 = vector.broadcast %c15_i32_31 : i32 to vector<96x128xi32>
    %54 = arith.cmpi slt, %50, %53 : vector<96x128xi32>
    %c1_i32_32 = arith.constant 1 : i32
    %55 = tpu.dynamic_rotate %46 by %c1_i32_32 dim 0 : vector<96x128xf32>, i32 -> vector<96x128xf32>
    %cst_33 = arith.constant 0.000000e+00 : f32
    %56 = vector.broadcast %cst_33 : f32 to vector<96x128xf32>
    %57 = arith.select %52, %55, %56 : vector<96x128xi1>, vector<96x128xf32>
    %c95_i32 = arith.constant 95 : i32
    %58 = tpu.dynamic_rotate %46 by %c95_i32 dim 0 : vector<96x128xf32>, i32 -> vector<96x128xf32>
    %cst_34 = arith.constant 0.000000e+00 : f32
    %59 = vector.broadcast %cst_34 : f32 to vector<96x128xf32>
    %60 = arith.select %54, %58, %59 : vector<96x128xi1>, vector<96x128xf32>
    %61 = vector.extract_strided_slice %47 {offsets = [1, 0, 0], sizes = [1, 1, 128], strides = [1, 1, 1]} : vector<3x3x128xf32> to vector<1x1x128xf32>
    %62 = vector.shape_cast %61 : vector<1x1x128xf32> to vector<128xf32>
    %63 = vector.shape_cast %62 : vector<128xf32> to vector<1x128xf32>
    %64 = vector.broadcast %63 : vector<1x128xf32> to vector<96x128xf32>
    %65 = arith.mulf %57, %64 : vector<96x128xf32>
    %66 = vector.extract_strided_slice %47 {offsets = [1, 1, 0], sizes = [1, 1, 128], strides = [1, 1, 1]} : vector<3x3x128xf32> to vector<1x1x128xf32>
    %67 = vector.shape_cast %66 : vector<1x1x128xf32> to vector<128xf32>
    %68 = vector.shape_cast %67 : vector<128xf32> to vector<1x128xf32>
    %69 = vector.broadcast %68 : vector<1x128xf32> to vector<96x128xf32>
    %70 = arith.mulf %46, %69 : vector<96x128xf32>
    %71 = arith.addf %65, %70 : vector<96x128xf32>
    %72 = vector.extract_strided_slice %47 {offsets = [1, 2, 0], sizes = [1, 1, 128], strides = [1, 1, 1]} : vector<3x3x128xf32> to vector<1x1x128xf32>
    %73 = vector.shape_cast %72 : vector<1x1x128xf32> to vector<128xf32>
    %74 = vector.shape_cast %73 : vector<128xf32> to vector<1x128xf32>
    %75 = vector.broadcast %74 : vector<1x128xf32> to vector<96x128xf32>
    %76 = arith.mulf %60, %75 : vector<96x128xf32>
    %77 = arith.addf %71, %76 : vector<96x128xf32>
    %78 = vector.extract_strided_slice %47 {offsets = [0, 0, 0], sizes = [1, 1, 128], strides = [1, 1, 1]} : vector<3x3x128xf32> to vector<1x1x128xf32>
    %79 = vector.shape_cast %78 : vector<1x1x128xf32> to vector<128xf32>
    %80 = vector.shape_cast %79 : vector<128xf32> to vector<1x128xf32>
    %81 = vector.broadcast %80 : vector<1x128xf32> to vector<96x128xf32>
    %82 = arith.mulf %57, %81 : vector<96x128xf32>
    %83 = vector.extract_strided_slice %47 {offsets = [0, 1, 0], sizes = [1, 1, 128], strides = [1, 1, 1]} : vector<3x3x128xf32> to vector<1x1x128xf32>
    %84 = vector.shape_cast %83 : vector<1x1x128xf32> to vector<128xf32>
    %85 = vector.shape_cast %84 : vector<128xf32> to vector<1x128xf32>
    %86 = vector.broadcast %85 : vector<1x128xf32> to vector<96x128xf32>
    %87 = arith.mulf %46, %86 : vector<96x128xf32>
    %88 = arith.addf %82, %87 : vector<96x128xf32>
    %89 = vector.extract_strided_slice %47 {offsets = [0, 2, 0], sizes = [1, 1, 128], strides = [1, 1, 1]} : vector<3x3x128xf32> to vector<1x1x128xf32>
    %90 = vector.shape_cast %89 : vector<1x1x128xf32> to vector<128xf32>
    %91 = vector.shape_cast %90 : vector<128xf32> to vector<1x128xf32>
    %92 = vector.broadcast %91 : vector<1x128xf32> to vector<96x128xf32>
    %93 = arith.mulf %60, %92 : vector<96x128xf32>
    %94 = arith.addf %88, %93 : vector<96x128xf32>
    %c16_i32 = arith.constant 16 : i32
    %95 = tpu.dynamic_rotate %94 by %c16_i32 dim 0 : vector<96x128xf32>, i32 -> vector<96x128xf32>
    %96 = arith.addf %77, %95 : vector<96x128xf32>
    %97 = vector.extract_strided_slice %47 {offsets = [2, 0, 0], sizes = [1, 1, 128], strides = [1, 1, 1]} : vector<3x3x128xf32> to vector<1x1x128xf32>
    %98 = vector.shape_cast %97 : vector<1x1x128xf32> to vector<128xf32>
    %99 = vector.shape_cast %98 : vector<128xf32> to vector<1x128xf32>
    %100 = vector.broadcast %99 : vector<1x128xf32> to vector<96x128xf32>
    %101 = arith.mulf %57, %100 : vector<96x128xf32>
    %102 = vector.extract_strided_slice %47 {offsets = [2, 1, 0], sizes = [1, 1, 128], strides = [1, 1, 1]} : vector<3x3x128xf32> to vector<1x1x128xf32>
    %103 = vector.shape_cast %102 : vector<1x1x128xf32> to vector<128xf32>
    %104 = vector.shape_cast %103 : vector<128xf32> to vector<1x128xf32>
    %105 = vector.broadcast %104 : vector<1x128xf32> to vector<96x128xf32>
    %106 = arith.mulf %46, %105 : vector<96x128xf32>
    %107 = arith.addf %101, %106 : vector<96x128xf32>
    %108 = vector.extract_strided_slice %47 {offsets = [2, 2, 0], sizes = [1, 1, 128], strides = [1, 1, 1]} : vector<3x3x128xf32> to vector<1x1x128xf32>
    %109 = vector.shape_cast %108 : vector<1x1x128xf32> to vector<128xf32>
    %110 = vector.shape_cast %109 : vector<128xf32> to vector<1x128xf32>
    %111 = vector.broadcast %110 : vector<1x128xf32> to vector<96x128xf32>
    %112 = arith.mulf %60, %111 : vector<96x128xf32>
    %113 = arith.addf %107, %112 : vector<96x128xf32>
    %c80_i32 = arith.constant 80 : i32
    %114 = tpu.dynamic_rotate %113 by %c80_i32 dim 0 : vector<96x128xf32>, i32 -> vector<96x128xf32>
    %115 = arith.addf %96, %114 : vector<96x128xf32>
    %c0_35 = arith.constant 0 : index
    %c0_36 = arith.constant 0 : index
    %116 = vector.load %arg8[%c0_35, %c0_36] : memref<1x128xf32, #tpu.memory_space<vmem>>, vector<1x128xf32>
    %117 = vector.extract_strided_slice %115 {offsets = [16, 0], sizes = [64, 128], strides = [1, 1]} : vector<96x128xf32> to vector<64x128xf32>
    %118 = vector.broadcast %116 : vector<1x128xf32> to vector<64x128xf32>
    %119 = arith.addf %117, %118 : vector<64x128xf32>
    %cst_37 = arith.constant 0.000000e+00 : f32
    %cst_38 = arith.constant 6.000000e+00 : f32
    %120 = vector.broadcast %cst_37 : f32 to vector<64x128xf32>
    %121 = arith.maximumf %120, %119 : vector<64x128xf32>
    %122 = vector.broadcast %cst_38 : f32 to vector<64x128xf32>
    %123 = arith.minimumf %122, %121 : vector<64x128xf32>
    %c0_39 = arith.constant 0 : index
    %c0_40 = arith.constant 0 : index
    %124 = vector.load %arg9[%c0_39, %c0_40] : memref<128x128xbf16, #tpu.memory_space<vmem>>, vector<128x128xbf16>
    %125 = arith.truncf %123 : vector<64x128xf32> to vector<64x128xbf16>
    %cst_41 = arith.constant dense<0.000000e+00> : vector<64x128xf32>
    %126 = tpu.matmul %125, %124, %cst_41 {dimension_numbers = #tpu.dot_dimension_numbers<[1], [0], [0], [1], [0, 0, 1, 1], [], []>} : vector<64x128xbf16>, vector<128x128xbf16>, vector<64x128xf32> -> vector<64x128xf32>
    %c0_42 = arith.constant 0 : index
    %c0_43 = arith.constant 0 : index
    %127 = vector.load %arg10[%c0_42, %c0_43] : memref<1x128xf32, #tpu.memory_space<vmem>>, vector<1x128xf32>
    %128 = vector.broadcast %127 : vector<1x128xf32> to vector<64x128xf32>
    %129 = arith.addf %126, %128 : vector<64x128xf32>
    %c0_44 = arith.constant 0 : index
    %c0_45 = arith.constant 0 : index
    %130 = vector.load %arg11[%c0_44, %c0_45] : memref<4x128xf32, #tpu.memory_space<vmem>>, vector<4x128xf32>
    %cst_46 = arith.constant dense<0.000000e+00> : vector<64x128xf32>
    %131 = tpu.matmul %1, %130, %cst_46 {dimension_numbers = #tpu.dot_dimension_numbers<[1], [0], [0], [1], [0, 0, 1, 1], [], []>} : vector<64x4xf32>, vector<4x128xf32>, vector<64x128xf32> -> vector<64x128xf32>
    %132 = arith.addf %129, %131 : vector<64x128xf32>
    %c0_47 = arith.constant 0 : index
    %c0_48 = arith.constant 0 : index
    %c0_49 = arith.constant 0 : index
    %133 = vector.load %arg12[%c0_47, %c0_48, %c0_49] : memref<1x64x128xf32, #tpu.memory_space<vmem>>, vector<1x64x128xf32>
    %134 = vector.shape_cast %133 : vector<1x64x128xf32> to vector<64x128xf32>
    %135 = vector.shape_cast %132 : vector<64x128xf32> to vector<1x64x128xf32>
    tpu.vector_store %arg12[%c0_47, %c0_48, %c0_49], %135 {strides = array<i32>} : memref<1x64x128xf32, #tpu.memory_space<vmem>>, vector<1x64x128xf32>,
    return
  }
  func.func @transform_0(%arg0: i32, %arg1: i32) -> (i32, i32, i32) {
    %c0_i32 = arith.constant 0 : i32
    %c0_i32_0 = arith.constant 0 : i32
    return %arg0, %arg1, %c0_i32 : i32, i32, i32
  }
  func.func @transform_1(%arg0: i32, %arg1: i32) -> (i32, i32, i32) {
    %c4_i32 = arith.constant 4 : i32
    %0 = arith.muli %arg1, %c4_i32 : i32
    %c1_i32 = arith.constant 1 : i32
    %1 = arith.subi %0, %c1_i32 : i32
    %c0_i32 = arith.constant 0 : i32
    %2 = arith.maxsi %1, %c0_i32 : i32
    %c0_i32_0 = arith.constant 0 : i32
    %c0_i32_1 = arith.constant 0 : i32
    return %arg0, %2, %c0_i32_0 : i32, i32, i32
  }
  func.func @transform_2(%arg0: i32, %arg1: i32) -> (i32, i32, i32) {
    %c1_i32 = arith.constant 1 : i32
    %0 = arith.addi %arg1, %c1_i32 : i32
    %c4_i32 = arith.constant 4 : i32
    %1 = arith.muli %0, %c4_i32 : i32
    %c15_i32 = arith.constant 15 : i32
    %2 = arith.minsi %1, %c15_i32 : i32
    %c0_i32 = arith.constant 0 : i32
    %c0_i32_0 = arith.constant 0 : i32
    return %arg0, %2, %c0_i32 : i32, i32, i32
  }
  func.func @transform_3(%arg0: i32, %arg1: i32) -> (i32, i32) {
    %c0_i32 = arith.constant 0 : i32
    %c0_i32_0 = arith.constant 0 : i32
    %c0_i32_1 = arith.constant 0 : i32
    return %c0_i32, %c0_i32_0 : i32, i32
  }
  func.func @transform_4(%arg0: i32, %arg1: i32) -> (i32, i32) {
    %c0_i32 = arith.constant 0 : i32
    %c0_i32_0 = arith.constant 0 : i32
    %c0_i32_1 = arith.constant 0 : i32
    return %c0_i32, %c0_i32_0 : i32, i32
  }
  func.func @transform_5(%arg0: i32, %arg1: i32) -> (i32, i32, i32) {
    %c0_i32 = arith.constant 0 : i32
    %c0_i32_0 = arith.constant 0 : i32
    %c0_i32_1 = arith.constant 0 : i32
    %c0_i32_2 = arith.constant 0 : i32
    return %c0_i32, %c0_i32_0, %c0_i32_1 : i32, i32, i32
  }
  func.func @transform_6(%arg0: i32, %arg1: i32) -> (i32, i32) {
    %c0_i32 = arith.constant 0 : i32
    %c0_i32_0 = arith.constant 0 : i32
    %c0_i32_1 = arith.constant 0 : i32
    return %c0_i32, %c0_i32_0 : i32, i32
  }
  func.func @transform_7(%arg0: i32, %arg1: i32) -> (i32, i32) {
    %c0_i32 = arith.constant 0 : i32
    %c0_i32_0 = arith.constant 0 : i32
    %c0_i32_1 = arith.constant 0 : i32
    return %c0_i32, %c0_i32_0 : i32, i32
  }
  func.func @transform_8(%arg0: i32, %arg1: i32) -> (i32, i32) {
    %c0_i32 = arith.constant 0 : i32
    %c0_i32_0 = arith.constant 0 : i32
    %c0_i32_1 = arith.constant 0 : i32
    return %c0_i32, %c0_i32_0 : i32, i32
  }
  func.func @transform_9(%arg0: i32, %arg1: i32) -> (i32, i32) {
    %c0_i32 = arith.constant 0 : i32
    %c0_i32_0 = arith.constant 0 : i32
    %c0_i32_1 = arith.constant 0 : i32
    return %c0_i32, %c0_i32_0 : i32, i32
  }
  func.func @transform_10(%arg0: i32, %arg1: i32) -> (i32, i32, i32) {
    %c0_i32 = arith.constant 0 : i32
    %c0_i32_0 = arith.constant 0 : i32
    return %arg0, %arg1, %c0_i32 : i32, i32, i32
  }
}

</mosaic_0001>

<llo_original>
// kernel: tpu_custom_call.1
$region0: #{tpu_custom_call.1}
  #allocation0 [shape = 'u32[]', space=smem, size = 0x4, offset = 0x4, fixed_abs, tag = 'smem constant byte address 0x4 - core index']
  #allocation1 [shape = 'u32[144,128]{1,0:T(1,128)}', space=vmem, size = 0x12000, scoped, tag = 'internal scratch']
  %s0 = inlined_call_operand.vmem [shape: f32[2,256,4], index: 0, kind: input, shape index: {}]
  %s1 = inlined_call_operand.vmem [shape: f32[2,256,4], index: 1, kind: input, shape index: {}]
  %s2 = inlined_call_operand.vmem [shape: f32[2,256,4], index: 2, kind: input, shape index: {}]
  %s3 = inlined_call_operand.vmem [shape: bf16[4,128], index: 3, kind: input, shape index: {}]
  %s4 = inlined_call_operand.vmem [shape: f32[1,128], index: 4, kind: input, shape index: {}]
  %s5 = inlined_call_operand.vmem [shape: f32[3,3,128], index: 5, kind: input, shape index: {}]
  %s6 = inlined_call_operand.vmem [shape: f32[1,128], index: 6, kind: input, shape index: {}]
  %s7 = inlined_call_operand.vmem [shape: bf16[128,128], index: 7, kind: input, shape index: {}]
  %s8 = inlined_call_operand.vmem [shape: f32[1,128], index: 8, kind: input, shape index: {}]
  %s9 = inlined_call_operand.vmem [shape: f32[4,128], index: 9, kind: input, shape index: {}]
  %s10 = inlined_call_operand.hbm [shape: f32[2,256,128], index: 10, kind: output, shape index: {}]
  %s11 = sld [smem:[#allocation0]]
  $region73: #{tpu_custom_call.1} parent=0
    _
  %s13 = ssub.s32 1, %s11
  %s14 = scalar_select 0, %s13, %s11
  $region1: #{tpu_custom_call.1} parent=0
    #allocation2 [shape = 'u8[65536]{0}', space=vmem, size = 0x10000, scoped, tag = 'output window, operand 0']
    #allocation3 [shape = 's32[2]{0}', space=sflag, size = 0x8, scoped, tag = 'scoped memory for tpu_custom_call.1']
    %15 = vsyncpa [#allocation3], 0
    %s16 = scalar_lea.sflag [#allocation3], 1
    %17 = vsyncpa %s16, 0
    loop: start=0, step=1, limit=10
    $region2: #{tpu_custom_call.1} parent=1 // loop_pre_header
      _
    $region3: #{tpu_custom_call.1} parent=1 // loop_header
      %s19 = sphi 0, %s23
      %p20 = scmp.ge.s32.totalorder %s19, 10
      %s26 = sphi 0, %s38
      %s27 = sphi 0, %s34
      %s28 = sphi 0, %s26
      %s29 = sphi 0, %s27
      %s30 = sphi 0, %s28
      %s31 = sphi 0, %s29
      %s43 = sphi 0, %s45
      %s46 = sphi 0, %s43
      %s47 = sphi 0, %s46
      %s63 = sphi 0, %s47
      %s79 = sphi 0, %s81
      %s82 = sphi 0, %s79
      %s83 = sphi 0, %s82
      %s99 = sphi 0, %s83
      %s115 = sphi 0, %s117
      %s118 = sphi 0, %s115
      %s119 = sphi 0, %s118
      %s135 = sphi 0, %s119
      %s139 = sphi 0, %s139
      %s141 = sphi 0, %s139
      %s142 = sphi 0, %s141
      %s156 = sphi 0, %s142
      %s160 = sphi 0, %s160
      %s162 = sphi 0, %s160
      %s163 = sphi 0, %s162
      %s177 = sphi 0, %s163
      %s181 = sphi 0, %s181
      %s183 = sphi 0, %s181
      %s184 = sphi 0, %s183
      %s198 = sphi 0, %s184
      %s202 = sphi 0, %s202
      %s204 = sphi 0, %s202
      %s205 = sphi 0, %s204
      %s219 = sphi 0, %s205
      %s223 = sphi 0, %s223
      %s225 = sphi 0, %s223
      %s226 = sphi 0, %s225
      %s240 = sphi 0, %s226
      %s244 = sphi 0, %s244
      %s246 = sphi 0, %s244
      %s247 = sphi 0, %s246
      %s261 = sphi 0, %s247
      %s265 = sphi 0, %s265
      %s267 = sphi 0, %s265
      %s268 = sphi 0, %s267
      %s282 = sphi 0, %s268
      %s290 = sphi 0, %s292
      %s293 = sphi 0, %s290
      %s294 = sphi 0, %s293
      %s310 = sphi 0, %s294
    $region4: #{tpu_custom_call.1} parent=1 // loop_header_branch
      %22 = sbr.rel (%p20) target = $region8
    $region5: #{tpu_custom_call.1} parent=1 // loop_body
      %s24 = ssub.s32 %s19, 1
      %s25 = ssub.s32 %s19, 2
      %s32 = sadd.s32 1, %s27
      %p33 = scmp.ge.s32.totalorder %s32, 4
      %s34 = scalar_select %p33, 0, %s32
      %s35 = sadd.s32 1, %s26
      %s36 = scalar_select %p33, %s35, %s26
      %p37 = scmp.ge.s32.totalorder %s36, 2
      %s38 = scalar_select %p37, 0, %s36
      %s39 = ssub.s32 %s26, %s38
      %s40 = ssub.s32 %s27, %s34
      %s41 = sor.u32 %s39, %s40
      %p42 = scmp.eq.s32.totalorder %s41, 0
      %s44 = sadd.s32 %s43, 1
      %s45 = scalar_select %p42, %s43, %s44
      %p48 = pneg %p42
      %p49 = scmp.eq.s32.totalorder %s19, 7
      %p50 = por %p48, %p49
      %p51 = scmp.ne.s32.totalorder %s43, %s46
      %p52 = scmp.eq.s32.totalorder %s19, 0
      %p53 = por %p51, %p52
      %p54 = scmp.ne.s32.totalorder %s43, %s46
      %p55 = scmp.eq.s32.totalorder %s24, 7
      %p56 = por %p54, %p55
      %p57 = scmp.ne.s32.totalorder %s46, %s47
      %p58 = scmp.eq.s32.totalorder %s24, 0
      %p59 = por %p57, %p58
      %p60 = scmp.ne.s32.totalorder %s46, %s47
      %p61 = scmp.eq.s32.totalorder %s25, 7
      %p62 = por %p60, %p61
      %p64 = scmp.ne.s32.totalorder %s47, %s63
      %p65 = scmp.eq.s32.totalorder %s25, 0
      %p66 = por %p64, %p65
      %s67 = smul.u32 %s27, 4
      %s68 = ssub.s32 %s67, 1
      %p69 = scmp.gt.s32.totalorder %s68, 0
      %s70 = scalar_select %p69, %s68, 0
      %s71 = smul.u32 %s34, 4
      %s72 = ssub.s32 %s71, 1
      %p73 = scmp.gt.s32.totalorder %s72, 0
      %s74 = scalar_select %p73, %s72, 0
      %s75 = ssub.s32 %s26, %s38
      %s76 = ssub.s32 %s70, %s74
      %s77 = sor.u32 %s75, %s76
      %p78 = scmp.eq.s32.totalorder %s77, 0
      %s80 = sadd.s32 %s79, 1
      %s81 = scalar_select %p78, %s79, %s80
      %p84 = pneg %p78
      %p85 = scmp.eq.s32.totalorder %s19, 7
      %p86 = por %p84, %p85
      %p87 = scmp.ne.s32.totalorder %s79, %s82
      %p88 = scmp.eq.s32.totalorder %s19, 0
      %p89 = por %p87, %p88
      %p90 = scmp.ne.s32.totalorder %s79, %s82
      %p91 = scmp.eq.s32.totalorder %s24, 7
      %p92 = por %p90, %p91
      %p93 = scmp.ne.s32.totalorder %s82, %s83
      %p94 = scmp.eq.s32.totalorder %s24, 0
      %p95 = por %p93, %p94
      %p96 = scmp.ne.s32.totalorder %s82, %s83
      %p97 = scmp.eq.s32.totalorder %s25, 7
      %p98 = por %p96, %p97
      %p100 = scmp.ne.s32.totalorder %s83, %s99
      %p101 = scmp.eq.s32.totalorder %s25, 0
      %p102 = por %p100, %p101
      %s103 = sadd.s32 %s27, 1
      %s104 = smul.u32 %s103, 4
      %p105 = scmp.lt.s32.totalorder %s104, 15
      %s106 = scalar_select %p105, %s104, 15
      %s107 = sadd.s32 %s34, 1
      %s108 = smul.u32 %s107, 4
      %p109 = scmp.lt.s32.totalorder %s108, 15
      %s110 = scalar_select %p109, %s108, 15
      %s111 = ssub.s32 %s26, %s38
      %s112 = ssub.s32 %s106, %s110
      %s113 = sor.u32 %s111, %s112
      %p114 = scmp.eq.s32.totalorder %s113, 0
      %s116 = sadd.s32 %s115, 1
      %s117 = scalar_select %p114, %s115, %s116
      %p120 = pneg %p114
      %p121 = scmp.eq.s32.totalorder %s19, 7
      %p122 = por %p120, %p121
      %p123 = scmp.ne.s32.totalorder %s115, %s118
      %p124 = scmp.eq.s32.totalorder %s19, 0
      %p125 = por %p123, %p124
      %p126 = scmp.ne.s32.totalorder %s115, %s118
      %p127 = scmp.eq.s32.totalorder %s24, 7
      %p128 = por %p126, %p127
      %p129 = scmp.ne.s32.totalorder %s118, %s119
      %p130 = scmp.eq.s32.totalorder %s24, 0
      %p131 = por %p129, %p130
      %p132 = scmp.ne.s32.totalorder %s118, %s119
      %p133 = scmp.eq.s32.totalorder %s25, 7
      %p134 = por %p132, %p133
      %p136 = scmp.ne.s32.totalorder %s119, %s135
      %p137 = scmp.eq.s32.totalorder %s25, 0
      %p138 = por %p136, %p137
      %s140 = sadd.s32 %s139, 1
      %p143 = scmp.eq.s32.totalorder %s19, 7
      %p144 = scmp.ne.s32.totalorder %s139, %s141
      %p145 = scmp.eq.s32.totalorder %s19, 0
      %p146 = por %p144, %p145
      %p147 = scmp.ne.s32.totalorder %s139, %s141
      %p148 = scmp.eq.s32.totalorder %s24, 7
      %p149 = por %p147, %p148
      %p150 = scmp.ne.s32.totalorder %s141, %s142
      %p151 = scmp.eq.s32.totalorder %s24, 0
      %p152 = por %p150, %p151
      %p153 = scmp.ne.s32.totalorder %s141, %s142
      %p154 = scmp.eq.s32.totalorder %s25, 7
      %p155 = por %p153, %p154
      %p157 = scmp.ne.s32.totalorder %s142, %s156
      %p158 = scmp.eq.s32.totalorder %s25, 0
      %p159 = por %p157, %p158
      %s161 = sadd.s32 %s160, 1
      %p164 = scmp.eq.s32.totalorder %s19, 7
      %p165 = scmp.ne.s32.totalorder %s160, %s162
      %p166 = scmp.eq.s32.totalorder %s19, 0
      %p167 = por %p165, %p166
      %p168 = scmp.ne.s32.totalorder %s160, %s162
      %p169 = scmp.eq.s32.totalorder %s24, 7
      %p170 = por %p168, %p169
      %p171 = scmp.ne.s32.totalorder %s162, %s163
      %p172 = scmp.eq.s32.totalorder %s24, 0
      %p173 = por %p171, %p172
      %p174 = scmp.ne.s32.totalorder %s162, %s163
      %p175 = scmp.eq.s32.totalorder %s25, 7
      %p176 = por %p174, %p175
      %p178 = scmp.ne.s32.totalorder %s163, %s177
      %p179 = scmp.eq.s32.totalorder %s25, 0
      %p180 = por %p178, %p179
      %s182 = sadd.s32 %s181, 1
      %p185 = scmp.eq.s32.totalorder %s19, 7
      %p186 = scmp.ne.s32.totalorder %s181, %s183
      %p187 = scmp.eq.s32.totalorder %s19, 0
      %p188 = por %p186, %p187
      %p189 = scmp.ne.s32.totalorder %s181, %s183
      %p190 = scmp.eq.s32.totalorder %s24, 7
      %p191 = por %p189, %p190
      %p192 = scmp.ne.s32.totalorder %s183, %s184
      %p193 = scmp.eq.s32.totalorder %s24, 0
      %p194 = por %p192, %p193
      %p195 = scmp.ne.s32.totalorder %s183, %s184
      %p196 = scmp.eq.s32.totalorder %s25, 7
      %p197 = por %p195, %p196
      %p199 = scmp.ne.s32.totalorder %s184, %s198
      %p200 = scmp.eq.s32.totalorder %s25, 0
      %p201 = por %p199, %p200
      %s203 = sadd.s32 %s202, 1
      %p206 = scmp.eq.s32.totalorder %s19, 7
      %p207 = scmp.ne.s32.totalorder %s202, %s204
      %p208 = scmp.eq.s32.totalorder %s19, 0
      %p209 = por %p207, %p208
      %p210 = scmp.ne.s32.totalorder %s202, %s204
      %p211 = scmp.eq.s32.totalorder %s24, 7
      %p212 = por %p210, %p211
      %p213 = scmp.ne.s32.totalorder %s204, %s205
      %p214 = scmp.eq.s32.totalorder %s24, 0
      %p215 = por %p213, %p214
      %p216 = scmp.ne.s32.totalorder %s204, %s205
      %p217 = scmp.eq.s32.totalorder %s25, 7
      %p218 = por %p216, %p217
      %p220 = scmp.ne.s32.totalorder %s205, %s219
      %p221 = scmp.eq.s32.totalorder %s25, 0
      %p222 = por %p220, %p221
      %s224 = sadd.s32 %s223, 1
      %p227 = scmp.eq.s32.totalorder %s19, 7
      %p228 = scmp.ne.s32.totalorder %s223, %s225
      %p229 = scmp.eq.s32.totalorder %s19, 0
      %p230 = por %p228, %p229
      %p231 = scmp.ne.s32.totalorder %s223, %s225
      %p232 = scmp.eq.s32.totalorder %s24, 7
      %p233 = por %p231, %p232
      %p234 = scmp.ne.s32.totalorder %s225, %s226
      %p235 = scmp.eq.s32.totalorder %s24, 0
      %p236 = por %p234, %p235
      %p237 = scmp.ne.s32.totalorder %s225, %s226
      %p238 = scmp.eq.s32.totalorder %s25, 7
      %p239 = por %p237, %p238
      %p241 = scmp.ne.s32.totalorder %s226, %s240
      %p242 = scmp.eq.s32.totalorder %s25, 0
      %p243 = por %p241, %p242
      %s245 = sadd.s32 %s244, 1
      %p248 = scmp.eq.s32.totalorder %s19, 7
      %p249 = scmp.ne.s32.totalorder %s244, %s246
      %p250 = scmp.eq.s32.totalorder %s19, 0
      %p251 = por %p249, %p250
      %p252 = scmp.ne.s32.totalorder %s244, %s246
      %p253 = scmp.eq.s32.totalorder %s24, 7
      %p254 = por %p252, %p253
      %p255 = scmp.ne.s32.totalorder %s246, %s247
      %p256 = scmp.eq.s32.totalorder %s24, 0
      %p257 = por %p255, %p256
      %p258 = scmp.ne.s32.totalorder %s246, %s247
      %p259 = scmp.eq.s32.totalorder %s25, 7
      %p260 = por %p258, %p259
      %p262 = scmp.ne.s32.totalorder %s247, %s261
      %p263 = scmp.eq.s32.totalorder %s25, 0
      %p264 = por %p262, %p263
      %s266 = sadd.s32 %s265, 1
      %p269 = scmp.eq.s32.totalorder %s19, 7
      %p270 = scmp.ne.s32.totalorder %s265, %s267
      %p271 = scmp.eq.s32.totalorder %s19, 0
      %p272 = por %p270, %p271
      %p273 = scmp.ne.s32.totalorder %s265, %s267
      %p274 = scmp.eq.s32.totalorder %s24, 7
      %p275 = por %p273, %p274
      %p276 = scmp.ne.s32.totalorder %s267, %s268
      %p277 = scmp.eq.s32.totalorder %s24, 0
      %p278 = por %p276, %p277
      %p279 = scmp.ne.s32.totalorder %s267, %s268
      %p280 = scmp.eq.s32.totalorder %s25, 7
      %p281 = por %p279, %p280
      %p283 = scmp.ne.s32.totalorder %s268, %s282
      %p284 = scmp.eq.s32.totalorder %s25, 0
      %p285 = por %p283, %p284
      %s286 = ssub.s32 %s26, %s38
      %s287 = ssub.s32 %s27, %s34
      %s288 = sor.u32 %s286, %s287
      %p289 = scmp.eq.s32.totalorder %s288, 0
      %s291 = sadd.s32 %s290, 1
      %s292 = scalar_select %p289, %s290, %s291
      %p295 = pneg %p289
      %p296 = scmp.eq.s32.totalorder %s19, 7
      %p297 = por %p295, %p296
      %p298 = scmp.ne.s32.totalorder %s290, %s293
      %p299 = scmp.eq.s32.totalorder %s19, 0
      %p300 = por %p298, %p299
      %p301 = scmp.ne.s32.totalorder %s290, %s293
      %p302 = scmp.eq.s32.totalorder %s24, 7
      %p303 = por %p301, %p302
      %p304 = scmp.ne.s32.totalorder %s293, %s294
      %p305 = scmp.eq.s32.totalorder %s24, 0
      %p306 = por %p304, %p305
      %p307 = scmp.ne.s32.totalorder %s293, %s294
      %p308 = scmp.eq.s32.totalorder %s25, 7
      %p309 = por %p307, %p308
      %p311 = scmp.ne.s32.totalorder %s294, %s310
      %p312 = scmp.eq.s32.totalorder %s25, 0
      %p313 = por %p311, %p312
      %p314 = scmp.le.s32.totalorder 1, %s19
      %p315 = scmp.lt.s32.totalorder %s19, 9
      %p316 = pnand %p314, %p315
      %p317 = pneg %p316
      // Predicated region
      $region9: #{tpu_custom_call.1} parent=5 // pred_check
        _
      $region10: #{tpu_custom_call.1} parent=5 // pred_check_branch
        %319 = sbr.rel (%p316) target = $region12
      $region11: #{tpu_custom_call.1} parent=5 // pred_region
        %s320 = ssub.s32 %s19, 1
        // Predicated region
        $region13: #{tpu_custom_call.1} parent=11 // pred_check
          %p321 = pneg %p152
        $region14: #{tpu_custom_call.1} parent=11 // pred_check_branch
          %323 = sbr.rel (%p321) target = $region16
        $region15: #{tpu_custom_call.1} parent=11 // pred_region
          _
        $region16: #{tpu_custom_call.1} parent=11 // pred_fallthru
          _
        // Predicated region
        $region17: #{tpu_custom_call.1} parent=11 // pred_check
          %p324 = pneg %p173
        $region18: #{tpu_custom_call.1} parent=11 // pred_check_branch
          %326 = sbr.rel (%p324) target = $region20
        $region19: #{tpu_custom_call.1} parent=11 // pred_region
          _
        $region20: #{tpu_custom_call.1} parent=11 // pred_fallthru
          _
        // Predicated region
        $region21: #{tpu_custom_call.1} parent=11 // pred_check
          %p327 = pneg %p194
        $region22: #{tpu_custom_call.1} parent=11 // pred_check_branch
          %329 = sbr.rel (%p327) target = $region24
        $region23: #{tpu_custom_call.1} parent=11 // pred_region
          _
        $region24: #{tpu_custom_call.1} parent=11 // pred_fallthru
          _
        // Predicated region
        $region25: #{tpu_custom_call.1} parent=11 // pred_check
          %p330 = pneg %p215
        $region26: #{tpu_custom_call.1} parent=11 // pred_check_branch
          %332 = sbr.rel (%p330) target = $region28
        $region27: #{tpu_custom_call.1} parent=11 // pred_region
          _
        $region28: #{tpu_custom_call.1} parent=11 // pred_fallthru
          _
        // Predicated region
        $region29: #{tpu_custom_call.1} parent=11 // pred_check
          %p333 = pneg %p236
        $region30: #{tpu_custom_call.1} parent=11 // pred_check_branch
          %335 = sbr.rel (%p333) target = $region32
        $region31: #{tpu_custom_call.1} parent=11 // pred_region
          _
        $region32: #{tpu_custom_call.1} parent=11 // pred_fallthru
          _
        // Predicated region
        $region33: #{tpu_custom_call.1} parent=11 // pred_check
          %p336 = pneg %p257
        $region34: #{tpu_custom_call.1} parent=11 // pred_check_branch
          %338 = sbr.rel (%p336) target = $region36
        $region35: #{tpu_custom_call.1} parent=11 // pred_region
          _
        $region36: #{tpu_custom_call.1} parent=11 // pred_fallthru
          _
        // Predicated region
        $region37: #{tpu_custom_call.1} parent=11 // pred_check
          %p339 = pneg %p278
        $region38: #{tpu_custom_call.1} parent=11 // pred_check_branch
          %341 = sbr.rel (%p339) target = $region40
        $region39: #{tpu_custom_call.1} parent=11 // pred_region
          _
        $region40: #{tpu_custom_call.1} parent=11 // pred_fallthru
          _
      $region12: #{tpu_custom_call.1} parent=5 // pred_fallthru
        _
      %p342 = scmp.lt.s32.totalorder %s19, 8
      // Predicated region
      $region41: #{tpu_custom_call.1} parent=5 // pred_check
        %p343 = pneg %p342
      $region42: #{tpu_custom_call.1} parent=5 // pred_check_branch
        %345 = sbr.rel (%p343) target = $region44
      $region43: #{tpu_custom_call.1} parent=5 // pred_region
        // Predicated region
        $region45: #{tpu_custom_call.1} parent=43 // pred_check
          %p346 = pneg %p53
        $region46: #{tpu_custom_call.1} parent=43 // pred_check_branch
          %348 = sbr.rel (%p346) target = $region48
        $region47: #{tpu_custom_call.1} parent=43 // pred_region
          %s349 = smul.u32 8, %s27
          %p350 = scmp.lt.s32.totalorder %s26, 1
          %s351 = scalar_select %p350, %s26, 1
          %p352 = scmp.lt.s32.totalorder %s349, 31
          %s353 = scalar_select %p352, %s349, 31
          %s354 = smul.addr %s351, 32
          %s355 = sadd.s32 %s353, %s354
          %s356 = smul.addr %s355, 8
          %s357 = scalar_lea.vmem %s0, %s356
          %s358 = smul.u32 8, %s27
        $region48: #{tpu_custom_call.1} parent=43 // pred_fallthru
          _
        // Predicated region
        $region49: #{tpu_custom_call.1} parent=43 // pred_check
          %p359 = pneg %p89
        $region50: #{tpu_custom_call.1} parent=43 // pred_check_branch
          %361 = sbr.rel (%p359) target = $region52
        $region51: #{tpu_custom_call.1} parent=43 // pred_region
          %s362 = smul.u32 %s27, 4
          %s363 = ssub.s32 %s362, 1
          %p364 = scmp.gt.s32.totalorder %s363, 0
          %s365 = scalar_select %p364, %s363, 0
          %s366 = smul.u32 2, %s365
          %p367 = scmp.lt.s32.totalorder %s26, 1
          %s368 = scalar_select %p367, %s26, 1
          %p369 = scmp.lt.s32.totalorder %s366, 31
          %s370 = scalar_select %p369, %s366, 31
          %s371 = smul.addr %s368, 32
          %s372 = sadd.s32 %s370, %s371
          %s373 = smul.addr %s372, 8
          %s374 = scalar_lea.vmem %s1, %s373
          %s375 = smul.u32 %s27, 4
          %s376 = ssub.s32 %s375, 1
          %p377 = scmp.gt.s32.totalorder %s376, 0
          %s378 = scalar_select %p377, %s376, 0
          %s379 = smul.u32 2, %s378
        $region52: #{tpu_custom_call.1} parent=43 // pred_fallthru
          _
        // Predicated region
        $region53: #{tpu_custom_call.1} parent=43 // pred_check
          %p380 = pneg %p125
        $region54: #{tpu_custom_call.1} parent=43 // pred_check_branch
          %382 = sbr.rel (%p380) target = $region56
        $region55: #{tpu_custom_call.1} parent=43 // pred_region
          %s383 = sadd.s32 %s27, 1
          %s384 = smul.u32 %s383, 4
          %p385 = scmp.lt.s32.totalorder %s384, 15
          %s386 = scalar_select %p385, %s384, 15
          %s387 = smul.u32 2, %s386
          %p388 = scmp.lt.s32.totalorder %s26, 1
          %s389 = scalar_select %p388, %s26, 1
          %p390 = scmp.lt.s32.totalorder %s387, 31
          %s391 = scalar_select %p390, %s387, 31
          %s392 = smul.addr %s389, 32
          %s393 = sadd.s32 %s391, %s392
          %s394 = smul.addr %s393, 8
          %s395 = scalar_lea.vmem %s2, %s394
          %s396 = sadd.s32 %s27, 1
          %s397 = smul.u32 %s396, 4
          %p398 = scmp.lt.s32.totalorder %s397, 15
          %s399 = scalar_select %p398, %s397, 15
          %s400 = smul.u32 2, %s399
        $region56: #{tpu_custom_call.1} parent=43 // pred_fallthru
          _
      $region44: #{tpu_custom_call.1} parent=5 // pred_fallthru
        _
      %p401 = scmp.le.s32.totalorder 1, %s19
      %p402 = scmp.lt.s32.totalorder %s19, 9
      %p403 = pnand %p401, %p402
      %p404 = pneg %p403
      // Predicated region
      $region57: #{tpu_custom_call.1} parent=5 // pred_check
        _
      $region58: #{tpu_custom_call.1} parent=5 // pred_check_branch
        %406 = sbr.rel (%p403) target = $region60
      $region59: #{tpu_custom_call.1} parent=5 // pred_region
        %s407 = ssub.s32 %s19, 1
        %s408 = smul.u32 8, %s29
        %p409 = scmp.lt.s32.totalorder %s28, 1
        %s410 = scalar_select %p409, %s28, 1
        %p411 = scmp.lt.s32.totalorder %s408, 31
        %s412 = scalar_select %p411, %s408, 31
        %s413 = smul.addr %s410, 32
        %s414 = sadd.s32 %s412, %s413
        %s415 = smul.addr %s414, 8
        %s416 = scalar_lea.vmem %s0, %s415
        %p417 = pneg %p59
        %p418 = pneg %p56
        %s419 = smul.u32 %s29, 4
        %s420 = ssub.s32 %s419, 1
        %p421 = scmp.gt.s32.totalorder %s420, 0
        %s422 = scalar_select %p421, %s420, 0
        %s423 = smul.u32 2, %s422
        %p424 = scmp.lt.s32.totalorder %s28, 1
        %s425 = scalar_select %p424, %s28, 1
        %p426 = scmp.lt.s32.totalorder %s423, 31
        %s427 = scalar_select %p426, %s423, 31
        %s428 = smul.addr %s425, 32
        %s429 = sadd.s32 %s427, %s428
        %s430 = smul.addr %s429, 8
        %s431 = scalar_lea.vmem %s1, %s430
        %p432 = pneg %p95
        %p433 = pneg %p92
        %s434 = sadd.s32 %s29, 1
        %s435 = smul.u32 %s434, 4
        %p436 = scmp.lt.s32.totalorder %s435, 15
        %s437 = scalar_select %p436, %s435, 15
        %s438 = smul.u32 2, %s437
        %p439 = scmp.lt.s32.totalorder %s28, 1
        %s440 = scalar_select %p439, %s28, 1
        %p441 = scmp.lt.s32.totalorder %s438, 31
        %s442 = scalar_select %p441, %s438, 31
        %s443 = smul.addr %s440, 32
        %s444 = sadd.s32 %s442, %s443
        %s445 = smul.addr %s444, 8
        %s446 = scalar_lea.vmem %s2, %s445
        %p447 = pneg %p131
        %p448 = pneg %p128
        %p449 = pneg %p152
        %p450 = pneg %p149
        %p451 = pneg %p173
        %p452 = pneg %p170
        %p453 = pneg %p194
        %p454 = pneg %p191
        %p455 = pneg %p215
        %p456 = pneg %p212
        %p457 = pneg %p236
        %p458 = pneg %p233
        %p459 = pneg %p257
        %p460 = pneg %p254
        %p461 = pneg %p278
        %p462 = pneg %p275
        %p463 = pneg %p306
        %p464 = pneg %p303
        %s465 = sand.u32 %s293, 1
        %s466 = scalar_lea.sflag [#allocation3], %s465
        %s467 = sand.u32 %s293, 1
        %s468 = smul.addr %s467, 64
        %s469 = scalar_lea.vmem [#allocation2], %s468
        %s470 = smul.u32 8, %s29
        %p471 = scmp.lt.s32.totalorder %s28, 1
        %s472 = scalar_select %p471, %s28, 1
        %p473 = scmp.lt.s32.totalorder %s470, 31
        %s474 = scalar_select %p473, %s470, 31
        %s475 = smul.addr %s472, 32
        %s476 = sadd.s32 %s474, %s475
        %s477 = smul.addr %s476, 8
        %s478 = scalar_lea.vmem %s0, %s477
        %s479 = smul.u32 8, %s29
        %s480 = smul.u32 %s29, 4
        %s481 = ssub.s32 %s480, 1
        %p482 = scmp.gt.s32.totalorder %s481, 0
        %s483 = scalar_select %p482, %s481, 0
        %s484 = smul.u32 2, %s483
        %p485 = scmp.lt.s32.totalorder %s28, 1
        %s486 = scalar_select %p485, %s28, 1
        %p487 = scmp.lt.s32.totalorder %s484, 31
        %s488 = scalar_select %p487, %s484, 31
        %s489 = smul.addr %s486, 32
        %s490 = sadd.s32 %s488, %s489
        %s491 = smul.addr %s490, 8
        %s492 = scalar_lea.vmem %s1, %s491
        %s493 = smul.u32 %s29, 4
        %s494 = ssub.s32 %s493, 1
        %p495 = scmp.gt.s32.totalorder %s494, 0
        %s496 = scalar_select %p495, %s494, 0
        %s497 = smul.u32 2, %s496
        %s498 = sadd.s32 %s29, 1
        %s499 = smul.u32 %s498, 4
        %p500 = scmp.lt.s32.totalorder %s499, 15
        %s501 = scalar_select %p500, %s499, 15
        %s502 = smul.u32 2, %s501
        %p503 = scmp.lt.s32.totalorder %s28, 1
        %s504 = scalar_select %p503, %s28, 1
        %p505 = scmp.lt.s32.totalorder %s502, 31
        %s506 = scalar_select %p505, %s502, 31
        %s507 = smul.addr %s504, 32
        %s508 = sadd.s32 %s506, %s507
        %s509 = smul.addr %s508, 8
        %s510 = scalar_lea.vmem %s2, %s509
        %s511 = sadd.s32 %s29, 1
        %s512 = smul.u32 %s511, 4
        %p513 = scmp.lt.s32.totalorder %s512, 15
        %s514 = scalar_select %p513, %s512, 15
        %s515 = smul.u32 2, %s514
        %s516 = smul.u32 8, %s29
        %v518 = vld [vmem:[%s478] sm:$0xff]
        %v519 = vld [vmem:[%s478 + $0x8] sm:$0xff]
        %v520 = vld [vmem:[%s478 + $0x10] sm:$0xff]
        %v521 = vld [vmem:[%s478 + $0x18] sm:$0xff]
        %v522 = vld [vmem:[%s478 + $0x20] sm:$0xff]
        %v523 = vld [vmem:[%s478 + $0x28] sm:$0xff]
        %v524 = vld [vmem:[%s478 + $0x30] sm:$0xff]
        %v525 = vld [vmem:[%s478 + $0x38] sm:$0xff]
        %v526 = vld [vmem:[%s3] sm:$0x3]
        %v527 = vpack.c.bf16 %v519, %v518
        %v528 = vpack.c.bf16 %v521, %v520
        %v529 = vpack.c.bf16 %v523, %v522
        %v530 = vpack.c.bf16 %v525, %v524
        %v531 = vld [vmem:[%s4] sm:$0x1]
        %v533 = vlaneseq
        %v534 = vshrl.u32 %v533, 7
        %v535 = vsub.s32 0, %v534
        %v536 = vrot.slane %v531, %v535
        %vm538 = vcmask 31744
        %v540 = vsel %vm538, %v527, 0
        %v543 = vsel %vm538, %v528, 0
        %v546 = vsel %vm538, %v529, 0
        %v549 = vsel %vm538, %v530, 0
        %vm551 = vcmask 1041408
        %v553 = vsel %vm551, %v526, 0
        %555 = vmatprep.subr.bf16.mxu0 0
        %556 = vmatpush1.bf16.msra.mxu0 %v553
        %557 = vmatprep.subr.bf16.mxu0 0
        %558 = vmatpush1.bf16.msra.mxu0 0
        %559 = vmatprep.subr.bf16.mxu0 0
        %560 = vmatpush1.bf16.msra.mxu0 0
        %561 = vmatprep.subr.bf16.mxu0 0
        %562 = vmatpush1.bf16.msra.mxu0 0
        %563 = vmatprep.subr.bf16.mxu0 0
        %564 = vmatpush1.bf16.msra.mxu0 0
        %565 = vmatprep.subr.bf16.mxu0 0
        %566 = vmatpush1.bf16.msra.mxu0 0
        %567 = vmatprep.subr.bf16.mxu0 0
        %568 = vmatpush1.bf16.msra.mxu0 0
        %569 = vmatprep.subr.bf16.mxu0 0
        %570 = vmatpush1.bf16.msra.mxu0 0
        %571 = vmatprep.subr.bf16.mxu0 0
        %572 = vmatpush1.bf16.msra.mxu0 0
        %573 = vmatprep.subr.bf16.mxu0 0
        %574 = vmatpush1.bf16.msra.mxu0 0
        %575 = vmatprep.subr.bf16.mxu0 0
        %576 = vmatpush1.bf16.msra.mxu0 0
        %577 = vmatprep.subr.bf16.mxu0 0
        %578 = vmatpush1.bf16.msra.mxu0 0
        %579 = vmatprep.subr.bf16.mxu0 0
        %580 = vmatpush1.bf16.msra.mxu0 0
        %581 = vmatprep.subr.bf16.mxu0 0
        %582 = vmatpush1.bf16.msra.mxu0 0
        %583 = vmatprep.subr.bf16.mxu0 0
        %584 = vmatpush1.bf16.msra.mxu0 0
        %585 = vmatprep.subr.bf16.mxu0 0
        %586 = vmatpush1.bf16.msra.mxu0 0
        %587 = vmatprep.mubr.bf16.mxu0 0
        %588 = vmatmul.mubr.bf16.gmra.mrb[0].mxu0 %v540
        %v589 = vpop.f32.mrb[0].mxu0
        %v590 = vadd.f32 %v536, %v589
        %v591 = vpop.f32.mrb[0].mxu0
        %v592 = vpop.f32.mrb[0].mxu0
        %v593 = vadd.f32 %v536, %v592
        %v594 = vpop.f32.mrb[0].mxu0
        %595 = vmatprep.mubr.bf16.mxu0 0
        %596 = vmatmul.mubr.bf16.gmra.mrb[0].mxu0 %v543
        %v597 = vpop.f32.mrb[0].mxu0
        %v598 = vadd.f32 %v536, %v597
        %v599 = vpop.f32.mrb[0].mxu0
        %v600 = vpop.f32.mrb[0].mxu0
        %v601 = vadd.f32 %v536, %v600
        %v602 = vpop.f32.mrb[0].mxu0
        %603 = vmatprep.mubr.bf16.mxu0 0
        %604 = vmatmul.mubr.bf16.gmra.mrb[0].mxu0 %v546
        %v605 = vpop.f32.mrb[0].mxu0
        %v606 = vadd.f32 %v536, %v605
        %v607 = vpop.f32.mrb[0].mxu0
        %v608 = vpop.f32.mrb[0].mxu0
        %v609 = vadd.f32 %v536, %v608
        %v610 = vpop.f32.mrb[0].mxu0
        %611 = vmatprep.mubr.bf16.mxu0 0
        %612 = vmatmul.mubr.bf16.gmra.mrb[0].mxu0 %v549
        %v613 = vpop.f32.mrb[0].mxu0
        %v614 = vadd.f32 %v536, %v613
        %v615 = vpop.f32.mrb[0].mxu0
        %v616 = vpop.f32.mrb[0].mxu0
        %v617 = vadd.f32 %v536, %v616
        %v618 = vpop.f32.mrb[0].mxu0
        %619 = vdwg.mxu0
        %v620 = vmax.f32 %v590, 0.0
        %v621 = vmax.f32 %v593, 0.0
        %v622 = vmax.f32 %v598, 0.0
        %v623 = vmax.f32 %v601, 0.0
        %v624 = vmax.f32 %v606, 0.0
        %v625 = vmax.f32 %v609, 0.0
        %v626 = vmax.f32 %v614, 0.0
        %v627 = vmax.f32 %v617, 0.0
        %v628 = vmin.f32 %v620, 6.0
        %v629 = vmin.f32 %v621, 6.0
        %v630 = vmin.f32 %v622, 6.0
        %v631 = vmin.f32 %v623, 6.0
        %v632 = vmin.f32 %v624, 6.0
        %v633 = vmin.f32 %v625, 6.0
        %v634 = vmin.f32 %v626, 6.0
        %v635 = vmin.f32 %v627, 6.0
        %v636 = vld [vmem:[%s492] sm:$0xff]
        %v637 = vld [vmem:[%s492 + $0x8] sm:$0xff]
        %v638 = vpack.c.bf16 %v637, %v636
        %v640 = vsel %vm538, %v638, 0
        %642 = vmatprep.subr.bf16.mxu0 0
        %643 = vmatpush1.bf16.msra.mxu0 %v553
        %644 = vmatprep.subr.bf16.mxu0 0
        %645 = vmatpush1.bf16.msra.mxu0 0
        %646 = vmatprep.subr.bf16.mxu0 0
        %647 = vmatpush1.bf16.msra.mxu0 0
        %648 = vmatprep.subr.bf16.mxu0 0
        %649 = vmatpush1.bf16.msra.mxu0 0
        %650 = vmatprep.subr.bf16.mxu0 0
        %651 = vmatpush1.bf16.msra.mxu0 0
        %652 = vmatprep.subr.bf16.mxu0 0
        %653 = vmatpush1.bf16.msra.mxu0 0
        %654 = vmatprep.subr.bf16.mxu0 0
        %655 = vmatpush1.bf16.msra.mxu0 0
        %656 = vmatprep.subr.bf16.mxu0 0
        %657 = vmatpush1.bf16.msra.mxu0 0
        %658 = vmatprep.subr.bf16.mxu0 0
        %659 = vmatpush1.bf16.msra.mxu0 0
        %660 = vmatprep.subr.bf16.mxu0 0
        %661 = vmatpush1.bf16.msra.mxu0 0
        %662 = vmatprep.subr.bf16.mxu0 0
        %663 = vmatpush1.bf16.msra.mxu0 0
        %664 = vmatprep.subr.bf16.mxu0 0
        %665 = vmatpush1.bf16.msra.mxu0 0
        %666 = vmatprep.subr.bf16.mxu0 0
        %667 = vmatpush1.bf16.msra.mxu0 0
        %668 = vmatprep.subr.bf16.mxu0 0
        %669 = vmatpush1.bf16.msra.mxu0 0
        %670 = vmatprep.subr.bf16.mxu0 0
        %671 = vmatpush1.bf16.msra.mxu0 0
        %672 = vmatprep.subr.bf16.mxu0 0
        %673 = vmatpush1.bf16.msra.mxu0 0
        %674 = vmatprep.mubr.bf16.mxu0 0
        %675 = vmatmul.mubr.bf16.gmra.mrb[0].mxu0 %v640
        %v676 = vpop.f32.mrb[0].mxu0
        %v677 = vadd.f32 %v536, %v676
        %v678 = vpop.f32.mrb[0].mxu0
        %v679 = vpop.f32.mrb[0].mxu0
        %v680 = vadd.f32 %v536, %v679
        %v681 = vpop.f32.mrb[0].mxu0
        %682 = vdwg.mxu0
        %v683 = vmax.f32 %v677, 0.0
        %v684 = vmax.f32 %v680, 0.0
        %v685 = vmin.f32 %v683, 6.0
        %v686 = vmin.f32 %v684, 6.0
        %p687 = scmp.gt.s32.totalorder %s29, 0
        %s688 = scalar_select %p687, 1, 0
        %s689 = scvt.s32.f32 %s688
        %v690 = vstv %s689
        %v691 = vmul.f32 %v685, %v690
        %v692 = vmul.f32 %v686, %v690
        %v693 = vld [vmem:[%s510] sm:$0xff]
        %v694 = vld [vmem:[%s510 + $0x8] sm:$0xff]
        %v695 = vpack.c.bf16 %v694, %v693
        %v697 = vsel %vm538, %v695, 0
        %699 = vmatprep.subr.bf16.mxu0 0
        %700 = vmatpush1.bf16.msra.mxu0 %v553
        %701 = vmatprep.subr.bf16.mxu0 0
        %702 = vmatpush1.bf16.msra.mxu0 0
        %703 = vmatprep.subr.bf16.mxu0 0
        %704 = vmatpush1.bf16.msra.mxu0 0
        %705 = vmatprep.subr.bf16.mxu0 0
        %706 = vmatpush1.bf16.msra.mxu0 0
        %707 = vmatprep.subr.bf16.mxu0 0
        %708 = vmatpush1.bf16.msra.mxu0 0
        %709 = vmatprep.subr.bf16.mxu0 0
        %710 = vmatpush1.bf16.msra.mxu0 0
        %711 = vmatprep.subr.bf16.mxu0 0
        %712 = vmatpush1.bf16.msra.mxu0 0
        %713 = vmatprep.subr.bf16.mxu0 0
        %714 = vmatpush1.bf16.msra.mxu0 0
        %715 = vmatprep.subr.bf16.mxu0 0
        %716 = vmatpush1.bf16.msra.mxu0 0
        %717 = vmatprep.subr.bf16.mxu0 0
        %718 = vmatpush1.bf16.msra.mxu0 0
        %719 = vmatprep.subr.bf16.mxu0 0
        %720 = vmatpush1.bf16.msra.mxu0 0
        %721 = vmatprep.subr.bf16.mxu0 0
        %722 = vmatpush1.bf16.msra.mxu0 0
        %723 = vmatprep.subr.bf16.mxu0 0
        %724 = vmatpush1.bf16.msra.mxu0 0
        %725 = vmatprep.subr.bf16.mxu0 0
        %726 = vmatpush1.bf16.msra.mxu0 0
        %727 = vmatprep.subr.bf16.mxu0 0
        %728 = vmatpush1.bf16.msra.mxu0 0
        %729 = vmatprep.subr.bf16.mxu0 0
        %730 = vmatpush1.bf16.msra.mxu0 0
        %731 = vmatprep.mubr.bf16.mxu0 0
        %732 = vmatmul.mubr.bf16.gmra.mrb[0].mxu0 %v697
        %v733 = vpop.f32.mrb[0].mxu0
        %v734 = vadd.f32 %v536, %v733
        %v735 = vpop.f32.mrb[0].mxu0
        %v736 = vpop.f32.mrb[0].mxu0
        %v737 = vadd.f32 %v536, %v736
        %v738 = vpop.f32.mrb[0].mxu0
        %739 = vdwg.mxu0
        %v740 = vmax.f32 %v734, 0.0
        %v741 = vmax.f32 %v737, 0.0
        %v742 = vmin.f32 %v740, 6.0
        %v743 = vmin.f32 %v741, 6.0
        %p744 = scmp.lt.s32.totalorder %s29, 3
        %s745 = scalar_select %p744, 1, 0
        %s746 = scvt.s32.f32 %s745
        %v747 = vstv %s746
        %v748 = vmul.f32 %v742, %v747
        %v749 = vmul.f32 %v743, %v747
        %v750 = vld [vmem:[%s5] sm:$0x7]
        %v751 = vld [vmem:[%s5 + $0x4] sm:$0x7]
        %v752 = vld [vmem:[%s5 + $0x8] sm:$0x7]
        %v753 = vlaneseq
        %v754 = vshrl.u32 %v753, 7
        %v755 = vadd.s32 %v754, 8
        %v756 = vadd.s32 %v754, 16
        %v757 = vadd.s32 %v754, 24
        %v758 = vadd.s32 %v754, 32
        %v759 = vadd.s32 %v754, 40
        %v760 = vadd.s32 %v754, 48
        %v761 = vadd.s32 %v754, 56
        %v762 = vadd.s32 %v754, 64
        %v763 = vadd.s32 %v754, 72
        %v764 = vadd.s32 %v754, 80
        %v765 = vadd.s32 %v754, 88
        %v766 = vand.u32 %v754, 15
        %v767 = vand.u32 %v755, 15
        %v768 = vand.u32 %v756, 15
        %v769 = vand.u32 %v757, 15
        %v770 = vand.u32 %v758, 15
        %v771 = vand.u32 %v759, 15
        %v772 = vand.u32 %v760, 15
        %v773 = vand.u32 %v761, 15
        %v774 = vand.u32 %v762, 15
        %v775 = vand.u32 %v763, 15
        %v776 = vand.u32 %v764, 15
        %v777 = vand.u32 %v765, 15
        %vm778 = vcmp.ge.s32.totalorder %v766, 1
        %vm779 = vcmp.ge.s32.totalorder %v767, 1
        %vm780 = vcmp.ge.s32.totalorder %v768, 1
        %vm781 = vcmp.ge.s32.totalorder %v769, 1
        %vm782 = vcmp.ge.s32.totalorder %v770, 1
        %vm783 = vcmp.ge.s32.totalorder %v771, 1
        %vm784 = vcmp.ge.s32.totalorder %v772, 1
        %vm785 = vcmp.ge.s32.totalorder %v773, 1
        %vm786 = vcmp.ge.s32.totalorder %v774, 1
        %vm787 = vcmp.ge.s32.totalorder %v775, 1
        %vm788 = vcmp.ge.s32.totalorder %v776, 1
        %vm789 = vcmp.ge.s32.totalorder %v777, 1
        %vm790 = vcmp.lt.s32.totalorder %v766, 15
        %vm791 = vcmp.lt.s32.totalorder %v767, 15
        %vm792 = vcmp.lt.s32.totalorder %v768, 15
        %vm793 = vcmp.lt.s32.totalorder %v769, 15
        %vm794 = vcmp.lt.s32.totalorder %v770, 15
        %vm795 = vcmp.lt.s32.totalorder %v771, 15
        %vm796 = vcmp.lt.s32.totalorder %v772, 15
        %vm797 = vcmp.lt.s32.totalorder %v773, 15
        %vm798 = vcmp.lt.s32.totalorder %v774, 15
        %vm799 = vcmp.lt.s32.totalorder %v775, 15
        %vm800 = vcmp.lt.s32.totalorder %v776, 15
        %vm801 = vcmp.lt.s32.totalorder %v777, 15
        %v802 = vrot.slane %v691, 7
        %v803 = vrot.slane %v692, 7
        %v804 = vrot.slane %v628, 7
        %v805 = vrot.slane %v629, 7
        %v806 = vrot.slane %v630, 7
        %v807 = vrot.slane %v631, 7
        %v808 = vrot.slane %v632, 7
        %v809 = vrot.slane %v633, 7
        %v810 = vrot.slane %v634, 7
        %v811 = vrot.slane %v635, 7
        %v812 = vrot.slane %v748, 7
        %v813 = vrot.slane %v749, 7
        %vm814 = vcmp.lt.s32.totalorder %v754, 1
        %v815 = vsel %vm814, %v812, %v813
        %v816 = vsel %vm814, %v811, %v812
        %v817 = vsel %vm814, %v810, %v811
        %v818 = vsel %vm814, %v809, %v810
        %v819 = vsel %vm814, %v808, %v809
        %v820 = vsel %vm814, %v807, %v808
        %v821 = vsel %vm814, %v806, %v807
        %v822 = vsel %vm814, %v805, %v806
        %v823 = vsel %vm814, %v804, %v805
        %v824 = vsel %vm814, %v803, %v804
        %v825 = vsel %vm814, %v802, %v803
        %v826 = vsel %vm814, %v813, %v802
        %v827 = vsel %vm778, %v826, 0.0
        %v828 = vsel %vm779, %v825, 0.0
        %v829 = vsel %vm780, %v824, 0.0
        %v830 = vsel %vm781, %v823, 0.0
        %v831 = vsel %vm782, %v822, 0.0
        %v832 = vsel %vm783, %v821, 0.0
        %v833 = vsel %vm784, %v820, 0.0
        %v834 = vsel %vm785, %v819, 0.0
        %v835 = vsel %vm786, %v818, 0.0
        %v836 = vsel %vm787, %v817, 0.0
        %v837 = vsel %vm788, %v816, 0.0
        %v838 = vsel %vm789, %v815, 0.0
        %v839 = vrot.slane %v691, 1
        %v840 = vrot.slane %v692, 1
        %v841 = vrot.slane %v628, 1
        %v842 = vrot.slane %v629, 1
        %v843 = vrot.slane %v630, 1
        %v844 = vrot.slane %v631, 1
        %v845 = vrot.slane %v632, 1
        %v846 = vrot.slane %v633, 1
        %v847 = vrot.slane %v634, 1
        %v848 = vrot.slane %v635, 1
        %v849 = vrot.slane %v748, 1
        %v850 = vrot.slane %v749, 1
        %vm851 = vcmp.lt.s32.totalorder %v754, 7
        %v852 = vsel %vm851, %v849, %v850
        %v853 = vsel %vm851, %v848, %v849
        %v854 = vsel %vm851, %v847, %v848
        %v855 = vsel %vm851, %v846, %v847
        %v856 = vsel %vm851, %v845, %v846
        %v857 = vsel %vm851, %v844, %v845
        %v858 = vsel %vm851, %v843, %v844
        %v859 = vsel %vm851, %v842, %v843
        %v860 = vsel %vm851, %v841, %v842
        %v861 = vsel %vm851, %v840, %v841
        %v862 = vsel %vm851, %v839, %v840
        %v863 = vsel %vm851, %v850, %v839
        %v864 = vsel %vm790, %v862, 0.0
        %v865 = vsel %vm791, %v861, 0.0
        %v866 = vsel %vm792, %v860, 0.0
        %v867 = vsel %vm793, %v859, 0.0
        %v868 = vsel %vm794, %v858, 0.0
        %v869 = vsel %vm795, %v857, 0.0
        %v870 = vsel %vm796, %v856, 0.0
        %v871 = vsel %vm797, %v855, 0.0
        %v872 = vsel %vm798, %v854, 0.0
        %v873 = vsel %vm799, %v853, 0.0
        %v874 = vsel %vm800, %v852, 0.0
        %v875 = vsel %vm801, %v863, 0.0
        %v876 = vlaneseq
        %v877 = vshrl.u32 %v876, 7
        %v878 = vsub.s32 0, %v877
        %v879 = vrot.slane %v751, %v878
        %v880 = vmul.f32 %v829, %v879
        %v881 = vmul.f32 %v830, %v879
        %v882 = vmul.f32 %v831, %v879
        %v883 = vmul.f32 %v832, %v879
        %v884 = vmul.f32 %v833, %v879
        %v885 = vmul.f32 %v834, %v879
        %v886 = vmul.f32 %v835, %v879
        %v887 = vmul.f32 %v836, %v879
        %v888 = vlaneseq
        %v889 = vshrl.u32 %v888, 7
        %v890 = vsub.s32 1, %v889
        %v891 = vrot.slane %v751, %v890
        %v892 = vmul.f32 %v628, %v891
        %v893 = vmul.f32 %v629, %v891
        %v894 = vmul.f32 %v630, %v891
        %v895 = vmul.f32 %v631, %v891
        %v896 = vmul.f32 %v632, %v891
        %v897 = vmul.f32 %v633, %v891
        %v898 = vmul.f32 %v634, %v891
        %v899 = vmul.f32 %v635, %v891
        %v900 = vadd.f32 %v880, %v892
        %v901 = vadd.f32 %v881, %v893
        %v902 = vadd.f32 %v882, %v894
        %v903 = vadd.f32 %v883, %v895
        %v904 = vadd.f32 %v884, %v896
        %v905 = vadd.f32 %v885, %v897
        %v906 = vadd.f32 %v886, %v898
        %v907 = vadd.f32 %v887, %v899
        %v908 = vlaneseq
        %v909 = vshrl.u32 %v908, 7
        %v910 = vsub.s32 2, %v909
        %v911 = vrot.slane %v751, %v910
        %v912 = vmul.f32 %v866, %v911
        %v913 = vmul.f32 %v867, %v911
        %v914 = vmul.f32 %v868, %v911
        %v915 = vmul.f32 %v869, %v911
        %v916 = vmul.f32 %v870, %v911
        %v917 = vmul.f32 %v871, %v911
        %v918 = vmul.f32 %v872, %v911
        %v919 = vmul.f32 %v873, %v911
        %v920 = vadd.f32 %v900, %v912
        %v921 = vadd.f32 %v901, %v913
        %v922 = vadd.f32 %v902, %v914
        %v923 = vadd.f32 %v903, %v915
        %v924 = vadd.f32 %v904, %v916
        %v925 = vadd.f32 %v905, %v917
        %v926 = vadd.f32 %v906, %v918
        %v927 = vadd.f32 %v907, %v919
        %v928 = vlaneseq
        %v929 = vshrl.u32 %v928, 7
        %v930 = vsub.s32 0, %v929
        %v931 = vrot.slane %v750, %v930
        %v932 = vmul.f32 %v827, %v931
        %v933 = vmul.f32 %v828, %v931
        %v934 = vmul.f32 %v829, %v931
        %v935 = vmul.f32 %v830, %v931
        %v936 = vmul.f32 %v831, %v931
        %v937 = vmul.f32 %v832, %v931
        %v938 = vmul.f32 %v833, %v931
        %v939 = vmul.f32 %v834, %v931
        %v940 = vlaneseq
        %v941 = vshrl.u32 %v940, 7
        %v942 = vsub.s32 1, %v941
        %v943 = vrot.slane %v750, %v942
        %v944 = vmul.f32 %v691, %v943
        %v945 = vmul.f32 %v692, %v943
        %v946 = vmul.f32 %v628, %v943
        %v947 = vmul.f32 %v629, %v943
        %v948 = vmul.f32 %v630, %v943
        %v949 = vmul.f32 %v631, %v943
        %v950 = vmul.f32 %v632, %v943
        %v951 = vmul.f32 %v633, %v943
        %v952 = vadd.f32 %v932, %v944
        %v953 = vadd.f32 %v933, %v945
        %v954 = vadd.f32 %v934, %v946
        %v955 = vadd.f32 %v935, %v947
        %v956 = vadd.f32 %v936, %v948
        %v957 = vadd.f32 %v937, %v949
        %v958 = vadd.f32 %v938, %v950
        %v959 = vadd.f32 %v939, %v951
        %v960 = vlaneseq
        %v961 = vshrl.u32 %v960, 7
        %v962 = vsub.s32 2, %v961
        %v963 = vrot.slane %v750, %v962
        %v964 = vmul.f32 %v864, %v963
        %v965 = vmul.f32 %v865, %v963
        %v966 = vmul.f32 %v866, %v963
        %v967 = vmul.f32 %v867, %v963
        %v968 = vmul.f32 %v868, %v963
        %v969 = vmul.f32 %v869, %v963
        %v970 = vmul.f32 %v870, %v963
        %v971 = vmul.f32 %v871, %v963
        %v972 = vadd.f32 %v952, %v964
        %v973 = vadd.f32 %v953, %v965
        %v974 = vadd.f32 %v954, %v966
        %v975 = vadd.f32 %v955, %v967
        %v976 = vadd.f32 %v956, %v968
        %v977 = vadd.f32 %v957, %v969
        %v978 = vadd.f32 %v958, %v970
        %v979 = vadd.f32 %v959, %v971
        %v980 = vadd.f32 %v920, %v972
        %v981 = vadd.f32 %v921, %v973
        %v982 = vadd.f32 %v922, %v974
        %v983 = vadd.f32 %v923, %v975
        %v984 = vadd.f32 %v924, %v976
        %v985 = vadd.f32 %v925, %v977
        %v986 = vadd.f32 %v926, %v978
        %v987 = vadd.f32 %v927, %v979
        %v988 = vlaneseq
        %v989 = vshrl.u32 %v988, 7
        %v990 = vsub.s32 0, %v989
        %v991 = vrot.slane %v752, %v990
        %v992 = vmul.f32 %v831, %v991
        %v993 = vmul.f32 %v832, %v991
        %v994 = vmul.f32 %v833, %v991
        %v995 = vmul.f32 %v834, %v991
        %v996 = vmul.f32 %v835, %v991
        %v997 = vmul.f32 %v836, %v991
        %v998 = vmul.f32 %v837, %v991
        %v999 = vmul.f32 %v838, %v991
        %v1000 = vlaneseq
        %v1001 = vshrl.u32 %v1000, 7
        %v1002 = vsub.s32 1, %v1001
        %v1003 = vrot.slane %v752, %v1002
        %v1004 = vmul.f32 %v630, %v1003
        %v1005 = vmul.f32 %v631, %v1003
        %v1006 = vmul.f32 %v632, %v1003
        %v1007 = vmul.f32 %v633, %v1003
        %v1008 = vmul.f32 %v634, %v1003
        %v1009 = vmul.f32 %v635, %v1003
        %v1010 = vmul.f32 %v748, %v1003
        %v1011 = vmul.f32 %v749, %v1003
        %v1012 = vadd.f32 %v992, %v1004
        %v1013 = vadd.f32 %v993, %v1005
        %v1014 = vadd.f32 %v994, %v1006
        %v1015 = vadd.f32 %v995, %v1007
        %v1016 = vadd.f32 %v996, %v1008
        %v1017 = vadd.f32 %v997, %v1009
        %v1018 = vadd.f32 %v998, %v1010
        %v1019 = vadd.f32 %v999, %v1011
        %v1020 = vlaneseq
        %v1021 = vshrl.u32 %v1020, 7
        %v1022 = vsub.s32 2, %v1021
        %v1023 = vrot.slane %v752, %v1022
        %v1024 = vmul.f32 %v868, %v1023
        %v1025 = vmul.f32 %v869, %v1023
        %v1026 = vmul.f32 %v870, %v1023
        %v1027 = vmul.f32 %v871, %v1023
        %v1028 = vmul.f32 %v872, %v1023
        %v1029 = vmul.f32 %v873, %v1023
        %v1030 = vmul.f32 %v874, %v1023
        %v1031 = vmul.f32 %v875, %v1023
        %v1032 = vadd.f32 %v1012, %v1024
        %v1033 = vadd.f32 %v1013, %v1025
        %v1034 = vadd.f32 %v1014, %v1026
        %v1035 = vadd.f32 %v1015, %v1027
        %v1036 = vadd.f32 %v1016, %v1028
        %v1037 = vadd.f32 %v1017, %v1029
        %v1038 = vadd.f32 %v1018, %v1030
        %v1039 = vadd.f32 %v1019, %v1031
        %v1040 = vadd.f32 %v980, %v1032
        %v1041 = vadd.f32 %v981, %v1033
        %v1042 = vadd.f32 %v982, %v1034
        %v1043 = vadd.f32 %v983, %v1035
        %v1044 = vadd.f32 %v984, %v1036
        %v1045 = vadd.f32 %v985, %v1037
        %v1046 = vadd.f32 %v986, %v1038
        %v1047 = vadd.f32 %v987, %v1039
        %v1048 = vld [vmem:[%s6] sm:$0x1]
        %v1050 = vlaneseq
        %v1051 = vshrl.u32 %v1050, 7
        %v1052 = vsub.s32 0, %v1051
        %v1053 = vrot.slane %v1048, %v1052
        %v1055 = vadd.f32 %v1040, %v1053
        %v1056 = vadd.f32 %v1041, %v1053
        %v1057 = vadd.f32 %v1042, %v1053
        %v1058 = vadd.f32 %v1043, %v1053
        %v1059 = vadd.f32 %v1044, %v1053
        %v1060 = vadd.f32 %v1045, %v1053
        %v1061 = vadd.f32 %v1046, %v1053
        %v1062 = vadd.f32 %v1047, %v1053
        %v1063 = vmax.f32 %v1055, 0.0
        %v1064 = vmax.f32 %v1056, 0.0
        %v1065 = vmax.f32 %v1057, 0.0
        %v1066 = vmax.f32 %v1058, 0.0
        %v1067 = vmax.f32 %v1059, 0.0
        %v1068 = vmax.f32 %v1060, 0.0
        %v1069 = vmax.f32 %v1061, 0.0
        %v1070 = vmax.f32 %v1062, 0.0
        %v1071 = vmin.f32 %v1063, 6.0
        %v1072 = vmin.f32 %v1064, 6.0
        %v1073 = vmin.f32 %v1065, 6.0
        %v1074 = vmin.f32 %v1066, 6.0
        %v1075 = vmin.f32 %v1067, 6.0
        %v1076 = vmin.f32 %v1068, 6.0
        %v1077 = vmin.f32 %v1069, 6.0
        %v1078 = vmin.f32 %v1070, 6.0
        %v1079 = vld [vmem:[%s7] sm:$0xf]
        %v1080 = vld [vmem:[%s7 + $0x4] sm:$0xf]
        %v1081 = vld [vmem:[%s7 + $0x8] sm:$0xf]
        %v1082 = vld [vmem:[%s7 + $0xc] sm:$0xf]
        %v1083 = vld [vmem:[%s7 + $0x10] sm:$0xf]
        %v1084 = vld [vmem:[%s7 + $0x14] sm:$0xf]
        %v1085 = vld [vmem:[%s7 + $0x18] sm:$0xf]
        %v1086 = vld [vmem:[%s7 + $0x1c] sm:$0xf]
        %v1087 = vld [vmem:[%s7 + $0x20] sm:$0xf]
        %v1088 = vld [vmem:[%s7 + $0x24] sm:$0xf]
        %v1089 = vld [vmem:[%s7 + $0x28] sm:$0xf]
        %v1090 = vld [vmem:[%s7 + $0x2c] sm:$0xf]
        %v1091 = vld [vmem:[%s7 + $0x30] sm:$0xf]
        %v1092 = vld [vmem:[%s7 + $0x34] sm:$0xf]
        %v1093 = vld [vmem:[%s7 + $0x38] sm:$0xf]
        %v1094 = vld [vmem:[%s7 + $0x3c] sm:$0xf]
        %v1095 = vpack.c.bf16 %v1072, %v1071
        %v1096 = vpack.c.bf16 %v1074, %v1073
        %v1097 = vpack.c.bf16 %v1076, %v1075
        %v1098 = vpack.c.bf16 %v1078, %v1077
        %v1099 = vld [vmem:[%s8] sm:$0x1]
        %v1101 = vlaneseq
        %v1102 = vshrl.u32 %v1101, 7
        %v1103 = vsub.s32 0, %v1102
        %v1104 = vrot.slane %v1099, %v1103
        %v1122 = vunpack.c.l.b16 %v1079
        %v1123 = vunpack.c.l.b16 %v1080
        %v1124 = vunpack.c.l.b16 %v1081
        %v1125 = vunpack.c.l.b16 %v1082
        %v1126 = vunpack.c.l.b16 %v1083
        %v1127 = vunpack.c.l.b16 %v1084
        %v1128 = vunpack.c.l.b16 %v1085
        %v1129 = vunpack.c.l.b16 %v1086
        %v1130 = vunpack.c.l.b16 %v1087
        %v1131 = vunpack.c.l.b16 %v1088
        %v1132 = vunpack.c.l.b16 %v1089
        %v1133 = vunpack.c.l.b16 %v1090
        %v1134 = vunpack.c.l.b16 %v1091
        %v1135 = vunpack.c.l.b16 %v1092
        %v1136 = vunpack.c.l.b16 %v1093
        %v1137 = vunpack.c.l.b16 %v1094
        %v1138 = vpack.c.b16 %v1123, %v1122
        %v1139 = vpack.c.b16 %v1125, %v1124
        %v1140 = vpack.c.b16 %v1127, %v1126
        %v1141 = vpack.c.b16 %v1129, %v1128
        %v1142 = vpack.c.b16 %v1131, %v1130
        %v1143 = vpack.c.b16 %v1133, %v1132
        %v1144 = vpack.c.b16 %v1135, %v1134
        %v1145 = vpack.c.b16 %v1137, %v1136
        %1154 = vmatprep.subr.bf16.mxu0 0
        %1155 = vmatpush1.bf16.msra.mxu0 %v1138
        %1156 = vmatprep.subr.bf16.mxu0 0
        %1157 = vmatpush1.bf16.msra.mxu0 %v1139
        %1158 = vmatprep.subr.bf16.mxu0 0
        %1159 = vmatpush1.bf16.msra.mxu0 %v1140
        %1160 = vmatprep.subr.bf16.mxu0 0
        %1161 = vmatpush1.bf16.msra.mxu0 %v1141
        %1162 = vmatprep.subr.bf16.mxu0 0
        %1163 = vmatpush1.bf16.msra.mxu0 %v1142
        %1164 = vmatprep.subr.bf16.mxu0 0
        %1165 = vmatpush1.bf16.msra.mxu0 %v1143
        %1166 = vmatprep.subr.bf16.mxu0 0
        %1167 = vmatpush1.bf16.msra.mxu0 %v1144
        %1168 = vmatprep.subr.bf16.mxu0 0
        %1169 = vmatpush1.bf16.msra.mxu0 %v1145
        %1170 = vmatprep.subr.bf16.mxu0 0
        %1171 = vmatpush1.bf16.msra.mxu0 0
        %1172 = vmatprep.subr.bf16.mxu0 0
        %1173 = vmatpush1.bf16.msra.mxu0 0
        %1174 = vmatprep.subr.bf16.mxu0 0
        %1175 = vmatpush1.bf16.msra.mxu0 0
        %1176 = vmatprep.subr.bf16.mxu0 0
        %1177 = vmatpush1.bf16.msra.mxu0 0
        %1178 = vmatprep.subr.bf16.mxu0 0
        %1179 = vmatpush1.bf16.msra.mxu0 0
        %1180 = vmatprep.subr.bf16.mxu0 0
        %1181 = vmatpush1.bf16.msra.mxu0 0
        %1182 = vmatprep.subr.bf16.mxu0 0
        %1183 = vmatpush1.bf16.msra.mxu0 0
        %1184 = vmatprep.subr.bf16.mxu0 0
        %1185 = vmatpush1.bf16.msra.mxu0 0
        %1186 = vmatprep.mubr.bf16.mxu0 0
        %1187 = vmatmul.mubr.bf16.gmra.mrb[0].mxu0 %v1095
        %v1188 = vpop.f32.mrb[0].mxu0
        %v1189 = vadd.f32 %v1104, %v1188
        %v1190 = vpop.f32.mrb[0].mxu0
        %v1191 = vpop.f32.mrb[0].mxu0
        %v1192 = vadd.f32 %v1104, %v1191
        %v1193 = vpop.f32.mrb[0].mxu0
        %1194 = vmatprep.mubr.bf16.mxu0 0
        %1195 = vmatmul.mubr.bf16.gmra.mrb[0].mxu0 %v1096
        %v1196 = vpop.f32.mrb[0].mxu0
        %v1197 = vadd.f32 %v1104, %v1196
        %v1198 = vpop.f32.mrb[0].mxu0
        %v1199 = vpop.f32.mrb[0].mxu0
        %v1200 = vadd.f32 %v1104, %v1199
        %v1201 = vpop.f32.mrb[0].mxu0
        %1202 = vmatprep.mubr.bf16.mxu0 0
        %1203 = vmatmul.mubr.bf16.gmra.mrb[0].mxu0 %v1097
        %v1204 = vpop.f32.mrb[0].mxu0
        %v1205 = vadd.f32 %v1104, %v1204
        %v1206 = vpop.f32.mrb[0].mxu0
        %v1207 = vpop.f32.mrb[0].mxu0
        %v1208 = vadd.f32 %v1104, %v1207
        %v1209 = vpop.f32.mrb[0].mxu0
        %1210 = vmatprep.mubr.bf16.mxu0 0
        %1211 = vmatmul.mubr.bf16.gmra.mrb[0].mxu0 %v1098
        %v1212 = vpop.f32.mrb[0].mxu0
        %v1213 = vadd.f32 %v1104, %v1212
        %v1214 = vpop.f32.mrb[0].mxu0
        %v1215 = vpop.f32.mrb[0].mxu0
        %v1216 = vadd.f32 %v1104, %v1215
        %v1217 = vpop.f32.mrb[0].mxu0
        %1218 = vdwg.mxu0
        %v1219 = vld [vmem:[%s9] sm:$0xf]
        %v1221 = vsel %vm538, %v518, 0
        %v1224 = vsel %vm538, %v519, 0
        %v1227 = vsel %vm538, %v520, 0
        %v1230 = vsel %vm538, %v521, 0
        %v1233 = vsel %vm538, %v522, 0
        %v1236 = vsel %vm538, %v523, 0
        %v1239 = vsel %vm538, %v524, 0
        %v1242 = vsel %vm538, %v525, 0
        %vm1244 = vcmask 1043456
        %v1246 = vsel %vm1244, %v1219, 0
        %1248 = vmatprep.subr.mxu0 0.0
        %1249 = vmatpush1.msra.mxu0 %v1246
        %1250 = vmatprep.subr.mxu0 0.0
        %1251 = vmatpush1.msra.mxu0 0.0
        %1252 = vmatprep.subr.mxu0 0.0
        %1253 = vmatpush1.msra.mxu0 0.0
        %1254 = vmatprep.subr.mxu0 0.0
        %1255 = vmatpush1.msra.mxu0 0.0
        %1256 = vmatprep.subr.mxu0 0.0
        %1257 = vmatpush1.msra.mxu0 0.0
        %1258 = vmatprep.subr.mxu0 0.0
        %1259 = vmatpush1.msra.mxu0 0.0
        %1260 = vmatprep.subr.mxu0 0.0
        %1261 = vmatpush1.msra.mxu0 0.0
        %1262 = vmatprep.subr.mxu0 0.0
        %1263 = vmatpush1.msra.mxu0 0.0
        %1264 = vmatprep.subr.mxu0 0.0
        %1265 = vmatpush1.msra.mxu0 0.0
        %1266 = vmatprep.subr.mxu0 0.0
        %1267 = vmatpush1.msra.mxu0 0.0
        %1268 = vmatprep.subr.mxu0 0.0
        %1269 = vmatpush1.msra.mxu0 0.0
        %1270 = vmatprep.subr.mxu0 0.0
        %1271 = vmatpush1.msra.mxu0 0.0
        %1272 = vmatprep.subr.mxu0 0.0
        %1273 = vmatpush1.msra.mxu0 0.0
        %1274 = vmatprep.subr.mxu0 0.0
        %1275 = vmatpush1.msra.mxu0 0.0
        %1276 = vmatprep.subr.mxu0 0.0
        %1277 = vmatpush1.msra.mxu0 0.0
        %1278 = vmatprep.subr.mxu0 0.0
        %1279 = vmatpush1.msra.mxu0 0.0
        %1280 = vmatprep.subr.mxu0 0.0
        %1281 = vmatpush1.msra.mxu0 0.0
        %1282 = vmatprep.subr.mxu0 0.0
        %1283 = vmatpush1.msra.mxu0 0.0
        %1284 = vmatprep.subr.mxu0 0.0
        %1285 = vmatpush1.msra.mxu0 0.0
        %1286 = vmatprep.subr.mxu0 0.0
        %1287 = vmatpush1.msra.mxu0 0.0
        %1288 = vmatprep.subr.mxu0 0.0
        %1289 = vmatpush1.msra.mxu0 0.0
        %1290 = vmatprep.subr.mxu0 0.0
        %1291 = vmatpush1.msra.mxu0 0.0
        %1292 = vmatprep.subr.mxu0 0.0
        %1293 = vmatpush1.msra.mxu0 0.0
        %1294 = vmatprep.subr.mxu0 0.0
        %1295 = vmatpush1.msra.mxu0 0.0
        %1296 = vmatprep.subr.mxu0 0.0
        %1297 = vmatpush1.msra.mxu0 0.0
        %1298 = vmatprep.subr.mxu0 0.0
        %1299 = vmatpush1.msra.mxu0 0.0
        %1300 = vmatprep.subr.mxu0 0.0
        %1301 = vmatpush1.msra.mxu0 0.0
        %1302 = vmatprep.subr.mxu0 0.0
        %1303 = vmatpush1.msra.mxu0 0.0
        %1304 = vmatprep.subr.mxu0 0.0
        %1305 = vmatpush1.msra.mxu0 0.0
        %1306 = vmatprep.subr.mxu0 0.0
        %1307 = vmatpush1.msra.mxu0 0.0
        %1308 = vmatprep.subr.mxu0 0.0
        %1309 = vmatpush1.msra.mxu0 0.0
        %1310 = vmatprep.subr.mxu0 0.0
        %1311 = vmatpush1.msra.mxu0 0.0
        %1312 = vmatprep.mubr.f32.mxu0 0.0
        %1313 = vmatmul.mubr.f32.gmra.mrb[0].mxu0 %v1221
        %v1314 = vpop.f32.mrb[0].mxu0
        %v1315 = vadd.f32 0.0, %v1314
        %v1316 = vpop.f32.mrb[0].mxu0
        %1317 = vmatprep.mubr.f32.mxu0 0.0
        %1318 = vmatmul.mubr.f32.gmra.mrb[0].mxu0 %v1224
        %v1319 = vpop.f32.mrb[0].mxu0
        %v1320 = vadd.f32 0.0, %v1319
        %v1321 = vpop.f32.mrb[0].mxu0
        %1322 = vmatprep.mubr.f32.mxu0 0.0
        %1323 = vmatmul.mubr.f32.gmra.mrb[0].mxu0 %v1227
        %v1324 = vpop.f32.mrb[0].mxu0
        %v1325 = vadd.f32 0.0, %v1324
        %v1326 = vpop.f32.mrb[0].mxu0
        %1327 = vmatprep.mubr.f32.mxu0 0.0
        %1328 = vmatmul.mubr.f32.gmra.mrb[0].mxu0 %v1230
        %v1329 = vpop.f32.mrb[0].mxu0
        %v1330 = vadd.f32 0.0, %v1329
        %v1331 = vpop.f32.mrb[0].mxu0
        %1332 = vmatprep.mubr.f32.mxu0 0.0
        %1333 = vmatmul.mubr.f32.gmra.mrb[0].mxu0 %v1233
        %v1334 = vpop.f32.mrb[0].mxu0
        %v1335 = vadd.f32 0.0, %v1334
        %v1336 = vpop.f32.mrb[0].mxu0
        %1337 = vmatprep.mubr.f32.mxu0 0.0
        %1338 = vmatmul.mubr.f32.gmra.mrb[0].mxu0 %v1236
        %v1339 = vpop.f32.mrb[0].mxu0
        %v1340 = vadd.f32 0.0, %v1339
        %v1341 = vpop.f32.mrb[0].mxu0
        %1342 = vmatprep.mubr.f32.mxu0 0.0
        %1343 = vmatmul.mubr.f32.gmra.mrb[0].mxu0 %v1239
        %v1344 = vpop.f32.mrb[0].mxu0
        %v1345 = vadd.f32 0.0, %v1344
        %v1346 = vpop.f32.mrb[0].mxu0
        %1347 = vmatprep.mubr.f32.mxu0 0.0
        %1348 = vmatmul.mubr.f32.gmra.mrb[0].mxu0 %v1242
        %v1349 = vpop.f32.mrb[0].mxu0
        %v1350 = vadd.f32 0.0, %v1349
        %v1351 = vpop.f32.mrb[0].mxu0
        %1352 = vdwg.mxu0
        %v1353 = vadd.f32 %v1189, %v1315
        %v1354 = vadd.f32 %v1192, %v1320
        %v1355 = vadd.f32 %v1197, %v1325
        %v1356 = vadd.f32 %v1200, %v1330
        %v1357 = vadd.f32 %v1205, %v1335
        %v1358 = vadd.f32 %v1208, %v1340
        %v1359 = vadd.f32 %v1213, %v1345
        %v1360 = vadd.f32 %v1216, %v1350
        %1361 = vst [vmem:[%s469] sm:$0xff] %v1353
        %1362 = vst [vmem:[%s469 + $0x8] sm:$0xff] %v1354
        %1363 = vst [vmem:[%s469 + $0x10] sm:$0xff] %v1355
        %1364 = vst [vmem:[%s469 + $0x18] sm:$0xff] %v1356
        %1365 = vst [vmem:[%s469 + $0x20] sm:$0xff] %v1357
        %1366 = vst [vmem:[%s469 + $0x28] sm:$0xff] %v1358
        %1367 = vst [vmem:[%s469 + $0x30] sm:$0xff] %v1359
        %1368 = vst [vmem:[%s469 + $0x38] sm:$0xff] %v1360
        %s1369 = sand.u32 %s293, 1
        %s1370 = scalar_lea.sflag [#allocation3], %s1369
        %s1371 = sand.u32 %s293, 1
        %s1372 = smul.addr %s1371, 64
        %s1373 = scalar_lea.vmem [#allocation2], %s1372
        // Predicated region
        $region61: #{tpu_custom_call.1} parent=59 // pred_check
          %p1374 = pneg %p303
        $region62: #{tpu_custom_call.1} parent=59 // pred_check_branch
          %1376 = sbr.rel (%p1374) target = $region64
        $region63: #{tpu_custom_call.1} parent=59 // pred_region
          %s1377 = smul.u32 8, %s29
          %s1379 = ssub.s32 1024, 1024
          %1380 = vsyncadd %s1370, %s1379
          %s1381 = smul.addr %s28, 32
          %s1382 = sadd.s32 %s1377, %s1381
          %s1383 = smul.addr %s1382, 128
          %s1384 = scalar_lea.hbm %s10, %s1383
          %s1385 = sshll.u32 %s1373, 4
          %s1386 = int_to_ptr.vmem [resolvable:$true] %s1385
          %1391 = dma.vmem_to_hbm [thread:$0]  %s1386, 1024, %s1384, %s1370, 128, 128, 8
        $region64: #{tpu_custom_call.1} parent=59 // pred_fallthru
          _
      $region60: #{tpu_custom_call.1} parent=5 // pred_fallthru
        _
      %p1392 = scmp.le.s32.totalorder 2, %s19
      // Predicated region
      $region65: #{tpu_custom_call.1} parent=5 // pred_check
        %p1393 = pneg %p1392
      $region66: #{tpu_custom_call.1} parent=5 // pred_check_branch
        %1395 = sbr.rel (%p1393) target = $region68
      $region67: #{tpu_custom_call.1} parent=5 // pred_region
        %s1396 = ssub.s32 %s19, 2
        // Predicated region
        $region69: #{tpu_custom_call.1} parent=67 // pred_check
          %p1397 = pneg %p309
        $region70: #{tpu_custom_call.1} parent=67 // pred_check_branch
          %1399 = sbr.rel (%p1397) target = $region72
        $region71: #{tpu_custom_call.1} parent=67 // pred_region
          %s1400 = sand.u32 %s294, 1
          %s1401 = scalar_lea.sflag [#allocation3], %s1400
          %s1402 = sand.u32 %s294, 1
          %s1403 = smul.addr %s1402, 64
          %s1404 = scalar_lea.vmem [#allocation2], %s1403
          %1405 = dma.done %s1401, 1024
        $region72: #{tpu_custom_call.1} parent=67 // pred_fallthru
          _
      $region68: #{tpu_custom_call.1} parent=5 // pred_fallthru
        _
    $region6: #{tpu_custom_call.1} parent=1 // loop_footer
      %s23 = sadd.s32 1, %s19
    $region7: #{tpu_custom_call.1} parent=1 // loop_footer_branch
      %18 = sbr.rel target = $region3
    $region8: #{tpu_custom_call.1} parent=1 // loop_exit
      _
    %1406 = vsyncpa [#allocation3], 1
    %s1407 = scalar_lea.sflag [#allocation3], 1
    %1408 = vsyncpa %s1407, 1

</llo_original>
